<compile_context>
chip_gen: v6e
topology: v6e:2x2x1
jax: 0.10.0
libtpu: 0.0.40
codegen_flags: <defaults>
</compile_context>

<pallas_src>
import functools

import jax
import jax.numpy as jnp
from jax import lax
from jax.experimental import pallas as pl
from jax.experimental.pallas import tpu as pltpu


_VMEM_LIMIT = 32 * 1024 * 1024  # safe on v5e/v6e/v7x (scoped default or below)


def _round_up(x, m):
    return ((x + m - 1) // m) * m


# --------------------------------------------------------------------------
# Kernel 1: tiled MXU matmul (used for wx = x @ W and s = wx @ A_sel)
# --------------------------------------------------------------------------
def _matmul_kernel(a_ref, b_ref, o_ref, acc_ref, *, precision):
    @pl.when(pl.program_id(2) == 0)
    def _():
        acc_ref[...] = jnp.zeros_like(acc_ref)
    acc_ref[...] += jnp.dot(a_ref[...], b_ref[...],
                            precision=precision,
                            preferred_element_type=jnp.float32)
    o_ref[...] = acc_ref[...].astype(o_ref.dtype)


def pallas_matmul(a, b, *, tm=128, tn=128, tk=256,
                  precision=lax.Precision.HIGHEST):
    """C = A @ B, tiled over (M, N, K). Tiles fall back to the full extent when a
    dimension is not a multiple of the preferred tile (full-extent blocks are
    always legal). HIGHEST keeps f32 fidelity with torch.mm; relax for bf16."""
    M, K = a.shape
    K2, N = b.shape
    assert K == K2
    tm = tm if M % tm == 0 else M
    tn = tn if N % tn == 0 else N
    tk = tk if K % tk == 0 else K
    kernel = functools.partial(_matmul_kernel, precision=precision)
    return pl.pallas_call(
        kernel,
        out_shape=jax.ShapeDtypeStruct((M, N), jnp.float32),
        grid=(M // tm, N // tn, K // tk),
        in_specs=[pl.BlockSpec((tm, tk), lambda i, j, k: (i, k)),
                  pl.BlockSpec((tk, tn), lambda i, j, k: (k, j))],
        out_specs=pl.BlockSpec((tm, tn), lambda i, j, k: (i, j)),
        scratch_shapes=[pltpu.VMEM((tm, tn), jnp.float32)],
        compiler_params=pltpu.CompilerParams(
            dimension_semantics=("parallel", "parallel", "arbitrary"),
            vmem_limit_bytes=_VMEM_LIMIT),
    )(a, b)


# --------------------------------------------------------------------------
# Edge-wise kernels: lane-dense [H, E] tiles, grid over edges
# --------------------------------------------------------------------------
def _edge_score_kernel(sl_ref, sr_ref, e_ref, *, slope):
    z = sl_ref[...] + sr_ref[...]
    e_ref[...] = jnp.where(z >= 0, z, slope * z)          # LeakyReLU


def _edge_exp_kernel(e_ref, m_ref, p_ref):
    p_ref[...] = jnp.exp(e_ref[...] - m_ref[...])


def _edge_norm_kernel(p_ref, d_ref, o_ref, *, eps):
    o_ref[...] = p_ref[...] / (d_ref[...] + eps)


def _edge_call(kernel, *arrays, tile_e):
    h, e_pad = arrays[0].shape
    spec = pl.BlockSpec((h, tile_e), lambda i: (0, i))
    return pl.pallas_call(
        kernel,
        out_shape=jax.ShapeDtypeStruct((h, e_pad), jnp.float32),
        grid=(e_pad // tile_e,),
        in_specs=[spec] * len(arrays),
        out_specs=spec,
        compiler_params=pltpu.CompilerParams(
            dimension_semantics=("parallel",),
            vmem_limit_bytes=_VMEM_LIMIT),
    )(*arrays)


# --------------------------------------------------------------------------
# Forward pass
# --------------------------------------------------------------------------
def sp_graph_attention_forward(x, W, a, edge, *, heads, leaky_relu_slope,
                               attention_norm_idx=0, tile_e=512):
    """Pallas implementation of SpGraphAttentionLayer.forward.
    Returns (attention [E, H], wx [N, attention_dim])."""
    x = x.astype(jnp.float32)
    W = W.astype(jnp.float32)
    N = x.shape[0]
    A_dim = W.shape[1]
    assert A_dim % heads == 0
    d_k = A_dim // heads
    E = edge.shape[1]

    # ---- node-level work on the MXU --------------------------------------
    wx = pallas_matmul(x, W)                                    # [N, A_dim]

    # Fold "sum_d a * h" into a per-node matmul:
    #   s_l[n,hd] = sum_d a[d]     * wx[n, hd*d_k + d]
    #   s_r[n,hd] = sum_d a[d_k+d] * wx[n, hd*d_k + d]
    a_vec = a.reshape(2 * d_k).astype(jnp.float32)
    eye_h = jnp.eye(heads, dtype=jnp.float32)
    A_sel = jnp.concatenate(
        [jnp.kron(eye_h, a_vec[:d_k, None]),
         jnp.kron(eye_h, a_vec[d_k:, None])], axis=1)           # [A_dim, 2H]
    s = pallas_matmul(wx, A_sel)                                # [N, 2H]

    # ---- edge-level work, lane-dense [H, E] layout ------------------------
    src = edge[0].astype(jnp.int32)
    dst = edge[1].astype(jnp.int32)
    idx = edge[attention_norm_idx].astype(jnp.int32)

    # TODO(synk): the row gathers and segment max/sum stay in XLA (review
    # option (a)); an in-kernel version needs sorted edges + scalar prefetch.
    s_src = jnp.take(s[:, :heads], src, axis=0).T               # [H, E]
    s_dst = jnp.take(s[:, heads:], dst, axis=0).T               # [H, E]

    tile_e = min(tile_e, _round_up(E, 128))
    E_pad = _round_up(E, tile_e)
    pad = E_pad - E
    s_src = jnp.pad(s_src, ((0, 0), (0, pad)))
    s_dst = jnp.pad(s_dst, ((0, 0), (0, pad)))
    idx_p = jnp.pad(idx, (0, pad), constant_values=N)           # dummy segment

    # edge_e = leaky_relu(s_l[src] + s_r[dst])
    edge_e = _edge_call(
        functools.partial(_edge_score_kernel, slope=float(leaky_relu_slope)),
        s_src, s_dst, tile_e=tile_e)                            # [H, E_pad]

    # scatter softmax over edges grouped by idx (torch_geometric semantics:
    # subtract segment max, exp, divide by segment sum + 1e-16).
    seg_max = jax.ops.segment_max(edge_e.T, idx_p, num_segments=N + 1)
    m_e = seg_max[idx_p].T                                      # [H, E_pad]
    p = _edge_call(_edge_exp_kernel, edge_e, m_e, tile_e=tile_e)
    seg_sum = jax.ops.segment_sum(p.T, idx_p, num_segments=N + 1)
    d_e = seg_sum[idx_p].T                                      # [H, E_pad]
    att = _edge_call(functools.partial(_edge_norm_kernel, eps=1e-16),
                     p, d_e, tile_e=tile_e)                     # [H, E_pad]

    attention = att[:, :E].T                                    # [E, H]
    return attention, wx


# --------------------------------------------------------------------------
# Pure-JAX reference mirroring the PyTorch forward
# --------------------------------------------------------------------------
def sp_graph_attention_ref(x, W, a, edge, *, heads, leaky_relu_slope,
                           attention_norm_idx=0):
    N = x.shape[0]
    A_dim = W.shape[1]
    d_k = A_dim // heads
    wx = jnp.dot(x, W, precision=lax.Precision.HIGHEST)         # [N, A_dim]
    h = wx.reshape(N, heads, d_k).transpose(0, 2, 1)            # [N, d_k, H]
    edge_h = jnp.concatenate([h[edge[0]], h[edge[1]]], axis=1)  # [E, 2dk, H]
    edge_h = edge_h.transpose(1, 0, 2)                          # [2dk, E, H]
    e = jnp.sum(a.reshape(2 * d_k, 1, 1) * edge_h, axis=0)      # [E, H]
    e = jnp.where(e >= 0, e, leaky_relu_slope * e)              # LeakyReLU
    idx = edge[attention_norm_idx]
    seg_max = jax.ops.segment_max(e, idx, num_segments=N)
    p = jnp.exp(e - seg_max[idx])
    denom = jax.ops.segment_sum(p, idx, num_segments=N)
    att = p / (denom[idx] + 1e-16)
    return att, wx


if __name__ == "__main__":
    key = jax.random.PRNGKey(0)
    N, in_features, heads, d_k = 256, 64, 4, 8
    attention_dim = heads * d_k          # 32
    E = 1024
    slope = 0.2
    norm_idx = 0                         # opt['attention_norm_idx']

    k1, k2, k3, k4 = jax.random.split(key, 4)
    x = jax.random.normal(k1, (N, in_features), dtype=jnp.float32)
    w_std = 1.414 * (2.0 / (in_features + attention_dim)) ** 0.5   # xavier_normal
    W = w_std * jax.random.normal(k2, (in_features, attention_dim), dtype=jnp.float32)
    a = 0.3 * jax.random.normal(k3, (2 * d_k, 1, 1), dtype=jnp.float32)
    edge = jax.random.randint(k4, (2, E), 0, N, dtype=jnp.int32)

    att, wx = sp_graph_attention_forward(
        x, W, a, edge, heads=heads, leaky_relu_slope=slope,
        attention_norm_idx=norm_idx)
    att, wx = jax.block_until_ready((att, wx))

    att_ref, wx_ref = sp_graph_attention_ref(
        x, W, a, edge, heads=heads, leaky_relu_slope=slope,
        attention_norm_idx=norm_idx)

    assert wx.shape == (N, attention_dim)
    assert att.shape == (E, heads)
    assert jnp.allclose(wx, wx_ref, rtol=1e-5, atol=1e-5), "wx mismatch"
    assert jnp.allclose(att, att_ref, rtol=1e-4, atol=1e-5), "attention mismatch"

    print("KERNEL_OK")
</pallas_src>

<mosaic_0001>
module attributes {stable_mosaic.version = 11 : i64} {
  func.func @_matmul_kernel(%arg0: i32, %arg1: i32, %arg2: i32, %arg3: memref<128x64xf32, #tpu.memory_space<vmem>>, %arg4: memref<64x32xf32, #tpu.memory_space<vmem>>, %arg5: memref<128x32xf32, #tpu.memory_space<vmem>>, %arg6: memref<128x32xf32, #tpu.memory_space<vmem>>) attributes {dimension_semantics = [#tpu.dimension_semantics<parallel>, #tpu.dimension_semantics<parallel>, #tpu.dimension_semantics<arbitrary>], iteration_bounds = array<i64: 2, 1, 1>, scalar_prefetch = 0 : i64, scratch_operands = 1 : i64, tpu.core_type = #tpu.core_type<tc>, window_params = [{transform_indices = @transform_0, window_bounds = array<i64: 128, 64>}, {transform_indices = @transform_1, window_bounds = array<i64: 64, 32>}, {transform_indices = @transform_2, window_bounds = array<i64: 128, 32>}]} {
    %c0_i32 = arith.constant 0 : i32
    %0 = arith.cmpi eq, %arg2, %c0_i32 : i32
    %1 = arith.extui %0 : i1 to i32
    %c0_i32_0 = arith.constant 0 : i32
    %2 = arith.cmpi ne, %1, %c0_i32_0 : i32
    scf.if %2 {
      %cst_12 = arith.constant 0.000000e+00 : f32
      %11 = vector.broadcast %cst_12 : f32 to vector<128x32xf32>
      %c0_13 = arith.constant 0 : index
      %c0_14 = arith.constant 0 : index
      %12 = vector.load %arg6[%c0_13, %c0_14] : memref<128x32xf32, #tpu.memory_space<vmem>>, vector<128x32xf32>
      tpu.vector_store %arg6[%c0_13, %c0_14], %11 {strides = array<i32>} : memref<128x32xf32, #tpu.memory_space<vmem>>, vector<128x32xf32>,
    } else {
    }
    %c0 = arith.constant 0 : index
    %c0_1 = arith.constant 0 : index
    %3 = vector.load %arg6[%c0, %c0_1] : memref<128x32xf32, #tpu.memory_space<vmem>>, vector<128x32xf32>
    %c0_2 = arith.constant 0 : index
    %c0_3 = arith.constant 0 : index
    %4 = vector.load %arg3[%c0_2, %c0_3] : memref<128x64xf32, #tpu.memory_space<vmem>>, vector<128x64xf32>
    %c0_4 = arith.constant 0 : index
    %c0_5 = arith.constant 0 : index
    %5 = vector.load %arg4[%c0_4, %c0_5] : memref<64x32xf32, #tpu.memory_space<vmem>>, vector<64x32xf32>
    %cst = arith.constant dense<0.000000e+00> : vector<128x32xf32>
    %6 = tpu.matmul %4, %5, %cst {dimension_numbers = #tpu.dot_dimension_numbers<[1], [0], [0], [1], [0, 0, 1, 1], [], []>, precision = #tpu.contract_precision<fp32>} : vector<128x64xf32>, vector<64x32xf32>, vector<128x32xf32> -> vector<128x32xf32>
    %7 = arith.addf %3, %6 : vector<128x32xf32>
    %c0_6 = arith.constant 0 : index
    %c0_7 = arith.constant 0 : index
    %8 = vector.load %arg6[%c0_6, %c0_7] : memref<128x32xf32, #tpu.memory_space<vmem>>, vector<128x32xf32>
    tpu.vector_store %arg6[%c0_6, %c0_7], %7 {strides = array<i32>} : memref<128x32xf32, #tpu.memory_space<vmem>>, vector<128x32xf32>,
    %c0_8 = arith.constant 0 : index
    %c0_9 = arith.constant 0 : index
    %9 = vector.load %arg6[%c0_8, %c0_9] : memref<128x32xf32, #tpu.memory_space<vmem>>, vector<128x32xf32>
    %c0_10 = arith.constant 0 : index
    %c0_11 = arith.constant 0 : index
    %10 = vector.load %arg5[%c0_10, %c0_11] : memref<128x32xf32, #tpu.memory_space<vmem>>, vector<128x32xf32>
    tpu.vector_store %arg5[%c0_10, %c0_11], %9 {strides = array<i32>} : memref<128x32xf32, #tpu.memory_space<vmem>>, vector<128x32xf32>,
    return
  }
  func.func @transform_0(%arg0: i32, %arg1: i32, %arg2: i32) -> (i32, i32) {
    %c0_i32 = arith.constant 0 : i32
    return %arg0, %arg2 : i32, i32
  }
  func.func @transform_1(%arg0: i32, %arg1: i32, %arg2: i32) -> (i32, i32) {
    %c0_i32 = arith.constant 0 : i32
    return %arg2, %arg1 : i32, i32
  }
  func.func @transform_2(%arg0: i32, %arg1: i32, %arg2: i32) -> (i32, i32) {
    %c0_i32 = arith.constant 0 : i32
    return %arg0, %arg1 : i32, i32
  }
}

</mosaic_0001>

<llo_original>
// kernel: tpu_custom_call.1
$region0: #{tpu_custom_call.1}
  #allocation0 [shape = 'u32[]', space=smem, size = 0x4, offset = 0x4, fixed_abs, tag = 'smem constant byte address 0x4 - core index']
  #allocation1 [shape = 'u32[144,128]{1,0:T(1,128)}', space=vmem, size = 0x12000, scoped, tag = 'internal scratch']
  #allocation2 [shape = 'f32[128,32]{1,0:T(8,128)}', space=vmem, size = 0x10000, scoped, tag = 'scratch operand']
  %s0 = inlined_call_operand.vmem [shape: f32[256,64], index: 0, kind: input, shape index: {}]
  %s1 = inlined_call_operand.vmem [shape: f32[64,32], index: 1, kind: input, shape index: {}]
  %s2 = inlined_call_operand.vmem [shape: f32[256,32], index: 2, kind: output, shape index: {}]
  %s3 = sld [smem:[#allocation0]]
  $region45: #{tpu_custom_call.1} parent=0
    _
  %s5 = ssub.s32 1, %s3
  %s6 = scalar_select 0, %s5, %s3
  loop: start=0, step=1, limit=4
  $region2: #{tpu_custom_call.1} parent=0 // loop_pre_header
    _
  $region3: #{tpu_custom_call.1} parent=0 // loop_header
    %s8 = sphi 0, %s12
    %p9 = scmp.ge.s32.totalorder %s8, 4
    %s15 = sphi 0, %s34
    %s16 = sphi 0, %s30
    %s17 = sphi 0, %s26
    %s18 = sphi 0, %s15
    %s19 = sphi 0, %s16
    %s20 = sphi 0, %s17
    %s21 = sphi 0, %s18
    %s22 = sphi 0, %s19
    %s23 = sphi 0, %s20
    %s39 = sphi 0, %s41
    %s42 = sphi 0, %s39
    %s43 = sphi 0, %s42
    %s59 = sphi 0, %s43
    %s67 = sphi 0, %s69
    %s70 = sphi 0, %s67
    %s71 = sphi 0, %s70
    %s87 = sphi 0, %s71
    %s95 = sphi 0, %s97
    %s98 = sphi 0, %s95
    %s99 = sphi 0, %s98
    %s115 = sphi 0, %s99
  $region4: #{tpu_custom_call.1} parent=0 // loop_header_branch
    %11 = sbr.rel (%p9) target = $region8
  $region5: #{tpu_custom_call.1} parent=0 // loop_body
    %s13 = ssub.s32 %s8, 1
    %s14 = ssub.s32 %s8, 2
    %s24 = sadd.s32 1, %s17
    %p25 = scmp.ge.s32.totalorder %s24, 1
    %s26 = scalar_select %p25, 0, %s24
    %s27 = sadd.s32 1, %s16
    %s28 = scalar_select %p25, %s27, %s16
    %p29 = scmp.ge.s32.totalorder %s28, 1
    %s30 = scalar_select %p29, 0, %s28
    %s31 = sadd.s32 1, %s15
    %s32 = scalar_select %p29, %s31, %s15
    %p33 = scmp.ge.s32.totalorder %s32, 2
    %s34 = scalar_select %p33, 0, %s32
    %s35 = ssub.s32 %s15, %s34
    %s36 = ssub.s32 %s17, %s26
    %s37 = sor.u32 %s35, %s36
    %p38 = scmp.eq.s32.totalorder %s37, 0
    %s40 = sadd.s32 %s39, 1
    %s41 = scalar_select %p38, %s39, %s40
    %p44 = pneg %p38
    %p45 = scmp.eq.s32.totalorder %s8, 1
    %p46 = por %p44, %p45
    %p47 = scmp.ne.s32.totalorder %s39, %s42
    %p48 = scmp.eq.s32.totalorder %s8, 0
    %p49 = por %p47, %p48
    %p50 = scmp.ne.s32.totalorder %s39, %s42
    %p51 = scmp.eq.s32.totalorder %s13, 1
    %p52 = por %p50, %p51
    %p53 = scmp.ne.s32.totalorder %s42, %s43
    %p54 = scmp.eq.s32.totalorder %s13, 0
    %p55 = por %p53, %p54
    %p56 = scmp.ne.s32.totalorder %s42, %s43
    %p57 = scmp.eq.s32.totalorder %s14, 1
    %p58 = por %p56, %p57
    %p60 = scmp.ne.s32.totalorder %s43, %s59
    %p61 = scmp.eq.s32.totalorder %s14, 0
    %p62 = por %p60, %p61
    %s63 = ssub.s32 %s17, %s26
    %s64 = ssub.s32 %s16, %s30
    %s65 = sor.u32 %s63, %s64
    %p66 = scmp.eq.s32.totalorder %s65, 0
    %s68 = sadd.s32 %s67, 1
    %s69 = scalar_select %p66, %s67, %s68
    %p72 = pneg %p66
    %p73 = scmp.eq.s32.totalorder %s8, 1
    %p74 = por %p72, %p73
    %p75 = scmp.ne.s32.totalorder %s67, %s70
    %p76 = scmp.eq.s32.totalorder %s8, 0
    %p77 = por %p75, %p76
    %p78 = scmp.ne.s32.totalorder %s67, %s70
    %p79 = scmp.eq.s32.totalorder %s13, 1
    %p80 = por %p78, %p79
    %p81 = scmp.ne.s32.totalorder %s70, %s71
    %p82 = scmp.eq.s32.totalorder %s13, 0
    %p83 = por %p81, %p82
    %p84 = scmp.ne.s32.totalorder %s70, %s71
    %p85 = scmp.eq.s32.totalorder %s14, 1
    %p86 = por %p84, %p85
    %p88 = scmp.ne.s32.totalorder %s71, %s87
    %p89 = scmp.eq.s32.totalorder %s14, 0
    %p90 = por %p88, %p89
    %s91 = ssub.s32 %s15, %s34
    %s92 = ssub.s32 %s16, %s30
    %s93 = sor.u32 %s91, %s92
    %p94 = scmp.eq.s32.totalorder %s93, 0
    %s96 = sadd.s32 %s95, 1
    %s97 = scalar_select %p94, %s95, %s96
    %p100 = pneg %p94
    %p101 = scmp.eq.s32.totalorder %s8, 1
    %p102 = por %p100, %p101
    %p103 = scmp.ne.s32.totalorder %s95, %s98
    %p104 = scmp.eq.s32.totalorder %s8, 0
    %p105 = por %p103, %p104
    %p106 = scmp.ne.s32.totalorder %s95, %s98
    %p107 = scmp.eq.s32.totalorder %s13, 1
    %p108 = por %p106, %p107
    %p109 = scmp.ne.s32.totalorder %s98, %s99
    %p110 = scmp.eq.s32.totalorder %s13, 0
    %p111 = por %p109, %p110
    %p112 = scmp.ne.s32.totalorder %s98, %s99
    %p113 = scmp.eq.s32.totalorder %s14, 1
    %p114 = por %p112, %p113
    %p116 = scmp.ne.s32.totalorder %s99, %s115
    %p117 = scmp.eq.s32.totalorder %s14, 0
    %p118 = por %p116, %p117
    %p119 = scmp.le.s32.totalorder 1, %s8
    %p120 = scmp.lt.s32.totalorder %s8, 3
    %p121 = pnand %p119, %p120
    %p122 = pneg %p121
    // Predicated region
    $region9: #{tpu_custom_call.1} parent=5 // pred_check
      _
    $region10: #{tpu_custom_call.1} parent=5 // pred_check_branch
      %124 = sbr.rel (%p121) target = $region12
    $region11: #{tpu_custom_call.1} parent=5 // pred_region
      %s125 = ssub.s32 %s8, 1
      // Predicated region
      $region13: #{tpu_custom_call.1} parent=11 // pred_check
        %p126 = pneg %p83
      $region14: #{tpu_custom_call.1} parent=11 // pred_check_branch
        %128 = sbr.rel (%p126) target = $region16
      $region15: #{tpu_custom_call.1} parent=11 // pred_region
        %s129 = smul.u32 8, %s20
        %p130 = scmp.lt.s32.totalorder %s129, 7
        %s131 = scalar_select %p130, %s129, 7
        %p132 = scmp.lt.s32.totalorder %s19, 0
        %s133 = scalar_select %p132, %s19, 0
        %s134 = sadd.s32 %s133, %s131
        %s135 = smul.addr %s134, 8
        %s136 = scalar_lea.vmem %s1, %s135
        %s137 = smul.u32 8, %s20
      $region16: #{tpu_custom_call.1} parent=11 // pred_fallthru
        _
    $region12: #{tpu_custom_call.1} parent=5 // pred_fallthru
      _
    %p138 = scmp.lt.s32.totalorder %s8, 2
    // Predicated region
    $region17: #{tpu_custom_call.1} parent=5 // pred_check
      %p139 = pneg %p138
    $region18: #{tpu_custom_call.1} parent=5 // pred_check_branch
      %141 = sbr.rel (%p139) target = $region20
    $region19: #{tpu_custom_call.1} parent=5 // pred_region
      // Predicated region
      $region21: #{tpu_custom_call.1} parent=19 // pred_check
        %p142 = pneg %p49
      $region22: #{tpu_custom_call.1} parent=19 // pred_check_branch
        %144 = sbr.rel (%p142) target = $region24
      $region23: #{tpu_custom_call.1} parent=19 // pred_region
        %s145 = smul.u32 16, %s15
        %p146 = scmp.lt.s32.totalorder %s145, 31
        %s147 = scalar_select %p146, %s145, 31
        %p148 = scmp.lt.s32.totalorder %s17, 0
        %s149 = scalar_select %p148, %s17, 0
        %s150 = sadd.s32 %s149, %s147
        %s151 = smul.addr %s150, 8
        %s152 = scalar_lea.vmem %s0, %s151
        %s153 = smul.u32 16, %s15
      $region24: #{tpu_custom_call.1} parent=19 // pred_fallthru
        _
    $region20: #{tpu_custom_call.1} parent=5 // pred_fallthru
      _
    %p154 = scmp.le.s32.totalorder 1, %s8
    %p155 = scmp.lt.s32.totalorder %s8, 3
    %p156 = pnand %p154, %p155
    %p157 = pneg %p156
    // Predicated region
    $region25: #{tpu_custom_call.1} parent=5 // pred_check
      _
    $region26: #{tpu_custom_call.1} parent=5 // pred_check_branch
      %159 = sbr.rel (%p156) target = $region28
    $region27: #{tpu_custom_call.1} parent=5 // pred_region
      %s160 = ssub.s32 %s8, 1
      %s161 = smul.u32 16, %s18
      %p162 = scmp.lt.s32.totalorder %s161, 31
      %s163 = scalar_select %p162, %s161, 31
      %p164 = scmp.lt.s32.totalorder %s20, 0
      %s165 = scalar_select %p164, %s20, 0
      %s166 = sadd.s32 %s165, %s163
      %s167 = smul.addr %s166, 8
      %s168 = scalar_lea.vmem %s0, %s167
      %p169 = pneg %p55
      %p170 = pneg %p52
      %s171 = smul.u32 8, %s20
      %p172 = scmp.lt.s32.totalorder %s171, 7
      %s173 = scalar_select %p172, %s171, 7
      %p174 = scmp.lt.s32.totalorder %s19, 0
      %s175 = scalar_select %p174, %s19, 0
      %s176 = sadd.s32 %s175, %s173
      %s177 = smul.addr %s176, 8
      %s178 = scalar_lea.vmem %s1, %s177
      %p179 = pneg %p83
      %p180 = pneg %p80
      %p181 = pneg %p111
      %p182 = pneg %p108
      %s183 = smul.u32 16, %s18
      %p184 = scmp.lt.s32.totalorder %s183, 31
      %s185 = scalar_select %p184, %s183, 31
      %p186 = scmp.lt.s32.totalorder %s19, 0
      %s187 = scalar_select %p186, %s19, 0
      %s188 = sadd.s32 %s187, %s185
      %s189 = smul.addr %s188, 8
      %s190 = scalar_lea.vmem %s2, %s189
      %s191 = smul.u32 16, %s18
      %p192 = scmp.lt.s32.totalorder %s191, 31
      %s193 = scalar_select %p192, %s191, 31
      %p194 = scmp.lt.s32.totalorder %s20, 0
      %s195 = scalar_select %p194, %s20, 0
      %s196 = sadd.s32 %s195, %s193
      %s197 = smul.addr %s196, 8
      %s198 = scalar_lea.vmem %s0, %s197
      %s199 = smul.u32 16, %s18
      %s200 = smul.u32 8, %s20
      %p201 = scmp.lt.s32.totalorder %s200, 7
      %s202 = scalar_select %p201, %s200, 7
      %p203 = scmp.lt.s32.totalorder %s19, 0
      %s204 = scalar_select %p203, %s19, 0
      %s205 = sadd.s32 %s204, %s202
      %s206 = smul.addr %s205, 8
      %s207 = scalar_lea.vmem %s1, %s206
      %s208 = smul.u32 8, %s20
      %s209 = smul.u32 16, %s18
      %p210 = scmp.lt.s32.totalorder %s209, 31
      %s211 = scalar_select %p210, %s209, 31
      %p212 = scmp.lt.s32.totalorder %s19, 0
      %s213 = scalar_select %p212, %s19, 0
      %s214 = sadd.s32 %s213, %s211
      %s215 = smul.addr %s214, 8
      %s216 = scalar_lea.vmem %s2, %s215
      %s217 = smul.u32 16, %s18
      %p218 = scmp.eq.s32.totalorder %s20, 0
      // Predicated region
      $region29: #{tpu_custom_call.1} parent=27 // pred_check
        %p219 = pneg %p218
      $region30: #{tpu_custom_call.1} parent=27 // pred_check_branch
        %221 = sbr.rel (%p219) target = $region32
      $region31: #{tpu_custom_call.1} parent=27 // pred_region
        %vm222 = vcmask 261120
        %223 = vst.msk [vmem:[#allocation2] sm:$0xff] %vm222, 0.0
        %224 = vst.msk [vmem:[#allocation2 + $0x8] sm:$0xff] %vm222, 0.0
        %225 = vst.msk [vmem:[#allocation2 + $0x10] sm:$0xff] %vm222, 0.0
        %226 = vst.msk [vmem:[#allocation2 + $0x18] sm:$0xff] %vm222, 0.0
        %227 = vst.msk [vmem:[#allocation2 + $0x20] sm:$0xff] %vm222, 0.0
        %228 = vst.msk [vmem:[#allocation2 + $0x28] sm:$0xff] %vm222, 0.0
        %229 = vst.msk [vmem:[#allocation2 + $0x30] sm:$0xff] %vm222, 0.0
        %230 = vst.msk [vmem:[#allocation2 + $0x38] sm:$0xff] %vm222, 0.0
        %231 = vst.msk [vmem:[#allocation2 + $0x40] sm:$0xff] %vm222, 0.0
        %232 = vst.msk [vmem:[#allocation2 + $0x48] sm:$0xff] %vm222, 0.0
        %233 = vst.msk [vmem:[#allocation2 + $0x50] sm:$0xff] %vm222, 0.0
        %234 = vst.msk [vmem:[#allocation2 + $0x58] sm:$0xff] %vm222, 0.0
        %235 = vst.msk [vmem:[#allocation2 + $0x60] sm:$0xff] %vm222, 0.0
        %236 = vst.msk [vmem:[#allocation2 + $0x68] sm:$0xff] %vm222, 0.0
        %237 = vst.msk [vmem:[#allocation2 + $0x70] sm:$0xff] %vm222, 0.0
        %238 = vst.msk [vmem:[#allocation2 + $0x78] sm:$0xff] %vm222, 0.0
      $region32: #{tpu_custom_call.1} parent=27 // pred_fallthru
        _
      %v239 = vld [vmem:[#allocation2] sm:$0xff]
      %v240 = vld [vmem:[#allocation2 + $0x8] sm:$0xff]
      %v241 = vld [vmem:[#allocation2 + $0x10] sm:$0xff]
      %v242 = vld [vmem:[#allocation2 + $0x18] sm:$0xff]
      %v243 = vld [vmem:[#allocation2 + $0x20] sm:$0xff]
      %v244 = vld [vmem:[#allocation2 + $0x28] sm:$0xff]
      %v245 = vld [vmem:[#allocation2 + $0x30] sm:$0xff]
      %v246 = vld [vmem:[#allocation2 + $0x38] sm:$0xff]
      %v247 = vld [vmem:[#allocation2 + $0x40] sm:$0xff]
      %v248 = vld [vmem:[#allocation2 + $0x48] sm:$0xff]
      %v249 = vld [vmem:[#allocation2 + $0x50] sm:$0xff]
      %v250 = vld [vmem:[#allocation2 + $0x58] sm:$0xff]
      %v251 = vld [vmem:[#allocation2 + $0x60] sm:$0xff]
      %v252 = vld [vmem:[#allocation2 + $0x68] sm:$0xff]
      %v253 = vld [vmem:[#allocation2 + $0x70] sm:$0xff]
      %v254 = vld [vmem:[#allocation2 + $0x78] sm:$0xff]
      %v255 = vld [vmem:[%s198] sm:$0xff]
      %v256 = vld [vmem:[%s198 + $0x8] sm:$0xff]
      %v257 = vld [vmem:[%s198 + $0x10] sm:$0xff]
      %v258 = vld [vmem:[%s198 + $0x18] sm:$0xff]
      %v259 = vld [vmem:[%s198 + $0x20] sm:$0xff]
      %v260 = vld [vmem:[%s198 + $0x28] sm:$0xff]
      %v261 = vld [vmem:[%s198 + $0x30] sm:$0xff]
      %v262 = vld [vmem:[%s198 + $0x38] sm:$0xff]
      %v263 = vld [vmem:[%s198 + $0x40] sm:$0xff]
      %v264 = vld [vmem:[%s198 + $0x48] sm:$0xff]
      %v265 = vld [vmem:[%s198 + $0x50] sm:$0xff]
      %v266 = vld [vmem:[%s198 + $0x58] sm:$0xff]
      %v267 = vld [vmem:[%s198 + $0x60] sm:$0xff]
      %v268 = vld [vmem:[%s198 + $0x68] sm:$0xff]
      %v269 = vld [vmem:[%s198 + $0x70] sm:$0xff]
      %v270 = vld [vmem:[%s198 + $0x78] sm:$0xff]
      %v271 = vld [vmem:[%s207] sm:$0xff]
      %v272 = vld [vmem:[%s207 + $0x8] sm:$0xff]
      %v273 = vld [vmem:[%s207 + $0x10] sm:$0xff]
      %v274 = vld [vmem:[%s207 + $0x18] sm:$0xff]
      %v275 = vld [vmem:[%s207 + $0x20] sm:$0xff]
      %v276 = vld [vmem:[%s207 + $0x28] sm:$0xff]
      %v277 = vld [vmem:[%s207 + $0x30] sm:$0xff]
      %v278 = vld [vmem:[%s207 + $0x38] sm:$0xff]
      %vm279 = vcmask 523264
      %v281 = vsel %vm279, %v255, 0
      %v284 = vsel %vm279, %v256, 0
      %v287 = vsel %vm279, %v257, 0
      %v290 = vsel %vm279, %v258, 0
      %v293 = vsel %vm279, %v259, 0
      %v296 = vsel %vm279, %v260, 0
      %v299 = vsel %vm279, %v261, 0
      %v302 = vsel %vm279, %v262, 0
      %v305 = vsel %vm279, %v263, 0
      %v308 = vsel %vm279, %v264, 0
      %v311 = vsel %vm279, %v265, 0
      %v314 = vsel %vm279, %v266, 0
      %v317 = vsel %vm279, %v267, 0
      %v320 = vsel %vm279, %v268, 0
      %v323 = vsel %vm279, %v269, 0
      %v326 = vsel %vm279, %v270, 0
      %328 = vmatprep.subr.mxu0 0.0
      %329 = vmatpush1.msra.mxu0 0.0
      %330 = vmatprep.subr.mxu0 0.0
      %331 = vmatpush1.msra.mxu0 0.0
      %332 = vmatprep.subr.mxu0 0.0
      %333 = vmatpush1.msra.mxu0 0.0
      %334 = vmatprep.subr.mxu0 0.0
      %335 = vmatpush1.msra.mxu0 0.0
      %336 = vmatprep.subr.mxu0 0.0
      %337 = vmatpush1.msra.mxu0 0.0
      %338 = vmatprep.subr.mxu0 0.0
      %339 = vmatpush1.msra.mxu0 0.0
      %340 = vmatprep.subr.mxu0 0.0
      %341 = vmatpush1.msra.mxu0 0.0
      %342 = vmatprep.subr.mxu0 0.0
      %343 = vmatpush1.msra.mxu0 0.0
      %344 = vmatprep.subr.mxu0 0.0
      %v345 = vand.u32 %v278, 4294901760
      %346 = vmatpush1.msra.mxu0 %v345
      %347 = vmatprep.subr.mxu0 0.0
      %v348 = vand.u32 %v277, 4294901760
      %349 = vmatpush1.msra.mxu0 %v348
      %350 = vmatprep.subr.mxu0 0.0
      %v351 = vand.u32 %v276, 4294901760
      %352 = vmatpush1.msra.mxu0 %v351
      %353 = vmatprep.subr.mxu0 0.0
      %v354 = vand.u32 %v275, 4294901760
      %355 = vmatpush1.msra.mxu0 %v354
      %356 = vmatprep.subr.mxu0 0.0
      %v357 = vand.u32 %v274, 4294901760
      %358 = vmatpush1.msra.mxu0 %v357
      %359 = vmatprep.subr.mxu0 0.0
      %v360 = vand.u32 %v273, 4294901760
      %361 = vmatpush1.msra.mxu0 %v360
      %362 = vmatprep.subr.mxu0 0.0
      %v363 = vand.u32 %v272, 4294901760
      %364 = vmatpush1.msra.mxu0 %v363
      %365 = vmatprep.subr.mxu0 0.0
      %v366 = vand.u32 %v271, 4294901760
      %367 = vmatpush1.msra.mxu0 %v366
      %368 = vmatprep.subr.mxu0 0.0
      %369 = vmatpush2.msra.mxu0 0.0
      %370 = vmatprep.subr.mxu0 0.0
      %371 = vmatpush2.msra.mxu0 0.0
      %372 = vmatprep.subr.mxu0 0.0
      %373 = vmatpush2.msra.mxu0 0.0
      %374 = vmatprep.subr.mxu0 0.0
      %375 = vmatpush2.msra.mxu0 0.0
      %376 = vmatprep.subr.mxu0 0.0
      %377 = vmatpush2.msra.mxu0 0.0
      %378 = vmatprep.subr.mxu0 0.0
      %379 = vmatpush2.msra.mxu0 0.0
      %380 = vmatprep.subr.mxu0 0.0
      %381 = vmatpush2.msra.mxu0 0.0
      %382 = vmatprep.subr.mxu0 0.0
      %383 = vmatpush2.msra.mxu0 0.0
      %384 = vmatprep.subr.mxu0 0.0
      %385 = vmatpush2.msra.mxu0 0.0
      %386 = vmatprep.subr.mxu0 0.0
      %387 = vmatpush2.msra.mxu0 0.0
      %388 = vmatprep.subr.mxu0 0.0
      %389 = vmatpush2.msra.mxu0 0.0
      %390 = vmatprep.subr.mxu0 0.0
      %391 = vmatpush2.msra.mxu0 0.0
      %392 = vmatprep.subr.mxu0 0.0
      %393 = vmatpush2.msra.mxu0 0.0
      %394 = vmatprep.subr.mxu0 0.0
      %395 = vmatpush2.msra.mxu0 0.0
      %396 = vmatprep.subr.mxu0 0.0
      %397 = vmatpush2.msra.mxu0 0.0
      %398 = vmatprep.subr.mxu0 0.0
      %399 = vmatpush2.msra.mxu0 0.0
      %400 = vmatprep.mubr.f32.mxu0 0.0
      %v401 = vand.u32 %v281, 4294901760
      %v402 = vsub.f32 %v281, %v401
      %v403 = vand.u32 %v402, 4294901760
      %v404 = vsub.f32 %v402, %v403
      %v405 = vand.u32 %v404, 4294901760
      %406 = vmatmul.mubr.f32.gmra.mxu0 %v405
      %v407 = vpop.f32.mrf.mxu0
      %v408 = vadd.f32 0.0, %v407
      %v409 = vpop.f32.mrf.mxu0
      %410 = vmatprep.mubr.f32.mxu0 0.0
      %v411 = vand.u32 %v284, 4294901760
      %v412 = vsub.f32 %v284, %v411
      %v413 = vand.u32 %v412, 4294901760
      %v414 = vsub.f32 %v412, %v413
      %v415 = vand.u32 %v414, 4294901760
      %416 = vmatmul.mubr.f32.gmra.mxu0 %v415
      %v417 = vpop.f32.mrf.mxu0
      %v418 = vadd.f32 0.0, %v417
      %v419 = vpop.f32.mrf.mxu0
      %420 = vmatprep.mubr.f32.mxu0 0.0
      %v421 = vand.u32 %v287, 4294901760
      %v422 = vsub.f32 %v287, %v421
      %v423 = vand.u32 %v422, 4294901760
      %v424 = vsub.f32 %v422, %v423
      %v425 = vand.u32 %v424, 4294901760
      %426 = vmatmul.mubr.f32.gmra.mxu0 %v425
      %v427 = vpop.f32.mrf.mxu0
      %v428 = vadd.f32 0.0, %v427
      %v429 = vpop.f32.mrf.mxu0
      %430 = vmatprep.mubr.f32.mxu0 0.0
      %v431 = vand.u32 %v290, 4294901760
      %v432 = vsub.f32 %v290, %v431
      %v433 = vand.u32 %v432, 4294901760
      %v434 = vsub.f32 %v432, %v433
      %v435 = vand.u32 %v434, 4294901760
      %436 = vmatmul.mubr.f32.gmra.mxu0 %v435
      %v437 = vpop.f32.mrf.mxu0
      %v438 = vadd.f32 0.0, %v437
      %v439 = vpop.f32.mrf.mxu0
      %440 = vmatprep.mubr.f32.mxu0 0.0
      %v441 = vand.u32 %v293, 4294901760
      %v442 = vsub.f32 %v293, %v441
      %v443 = vand.u32 %v442, 4294901760
      %v444 = vsub.f32 %v442, %v443
      %v445 = vand.u32 %v444, 4294901760
      %446 = vmatmul.mubr.f32.gmra.mxu0 %v445
      %v447 = vpop.f32.mrf.mxu0
      %v448 = vadd.f32 0.0, %v447
      %v449 = vpop.f32.mrf.mxu0
      %450 = vmatprep.mubr.f32.mxu0 0.0
      %v451 = vand.u32 %v296, 4294901760
      %v452 = vsub.f32 %v296, %v451
      %v453 = vand.u32 %v452, 4294901760
      %v454 = vsub.f32 %v452, %v453
      %v455 = vand.u32 %v454, 4294901760
      %456 = vmatmul.mubr.f32.gmra.mxu0 %v455
      %v457 = vpop.f32.mrf.mxu0
      %v458 = vadd.f32 0.0, %v457
      %v459 = vpop.f32.mrf.mxu0
      %460 = vmatprep.mubr.f32.mxu0 0.0
      %v461 = vand.u32 %v299, 4294901760
      %v462 = vsub.f32 %v299, %v461
      %v463 = vand.u32 %v462, 4294901760
      %v464 = vsub.f32 %v462, %v463
      %v465 = vand.u32 %v464, 4294901760
      %466 = vmatmul.mubr.f32.gmra.mxu0 %v465
      %v467 = vpop.f32.mrf.mxu0
      %v468 = vadd.f32 0.0, %v467
      %v469 = vpop.f32.mrf.mxu0
      %470 = vmatprep.mubr.f32.mxu0 0.0
      %v471 = vand.u32 %v302, 4294901760
      %v472 = vsub.f32 %v302, %v471
      %v473 = vand.u32 %v472, 4294901760
      %v474 = vsub.f32 %v472, %v473
      %v475 = vand.u32 %v474, 4294901760
      %476 = vmatmul.mubr.f32.gmra.mxu0 %v475
      %v477 = vpop.f32.mrf.mxu0
      %v478 = vadd.f32 0.0, %v477
      %v479 = vpop.f32.mrf.mxu0
      %480 = vmatprep.mubr.f32.mxu0 0.0
      %v481 = vand.u32 %v305, 4294901760
      %v482 = vsub.f32 %v305, %v481
      %v483 = vand.u32 %v482, 4294901760
      %v484 = vsub.f32 %v482, %v483
      %v485 = vand.u32 %v484, 4294901760
      %486 = vmatmul.mubr.f32.gmra.mxu0 %v485
      %v487 = vpop.f32.mrf.mxu0
      %v488 = vadd.f32 0.0, %v487
      %v489 = vpop.f32.mrf.mxu0
      %490 = vmatprep.mubr.f32.mxu0 0.0
      %v491 = vand.u32 %v308, 4294901760
      %v492 = vsub.f32 %v308, %v491
      %v493 = vand.u32 %v492, 4294901760
      %v494 = vsub.f32 %v492, %v493
      %v495 = vand.u32 %v494, 4294901760
      %496 = vmatmul.mubr.f32.gmra.mxu0 %v495
      %v497 = vpop.f32.mrf.mxu0
      %v498 = vadd.f32 0.0, %v497
      %v499 = vpop.f32.mrf.mxu0
      %500 = vmatprep.mubr.f32.mxu0 0.0
      %v501 = vand.u32 %v311, 4294901760
      %v502 = vsub.f32 %v311, %v501
      %v503 = vand.u32 %v502, 4294901760
      %v504 = vsub.f32 %v502, %v503
      %v505 = vand.u32 %v504, 4294901760
      %506 = vmatmul.mubr.f32.gmra.mxu0 %v505
      %v507 = vpop.f32.mrf.mxu0
      %v508 = vadd.f32 0.0, %v507
      %v509 = vpop.f32.mrf.mxu0
      %510 = vmatprep.mubr.f32.mxu0 0.0
      %v511 = vand.u32 %v314, 4294901760
      %v512 = vsub.f32 %v314, %v511
      %v513 = vand.u32 %v512, 4294901760
      %v514 = vsub.f32 %v512, %v513
      %v515 = vand.u32 %v514, 4294901760
      %516 = vmatmul.mubr.f32.gmra.mxu0 %v515
      %v517 = vpop.f32.mrf.mxu0
      %v518 = vadd.f32 0.0, %v517
      %v519 = vpop.f32.mrf.mxu0
      %520 = vmatprep.mubr.f32.mxu0 0.0
      %v521 = vand.u32 %v317, 4294901760
      %v522 = vsub.f32 %v317, %v521
      %v523 = vand.u32 %v522, 4294901760
      %v524 = vsub.f32 %v522, %v523
      %v525 = vand.u32 %v524, 4294901760
      %526 = vmatmul.mubr.f32.gmra.mxu0 %v525
      %v527 = vpop.f32.mrf.mxu0
      %v528 = vadd.f32 0.0, %v527
      %v529 = vpop.f32.mrf.mxu0
      %530 = vmatprep.mubr.f32.mxu0 0.0
      %v531 = vand.u32 %v320, 4294901760
      %v532 = vsub.f32 %v320, %v531
      %v533 = vand.u32 %v532, 4294901760
      %v534 = vsub.f32 %v532, %v533
      %v535 = vand.u32 %v534, 4294901760
      %536 = vmatmul.mubr.f32.gmra.mxu0 %v535
      %v537 = vpop.f32.mrf.mxu0
      %v538 = vadd.f32 0.0, %v537
      %v539 = vpop.f32.mrf.mxu0
      %540 = vmatprep.mubr.f32.mxu0 0.0
      %v541 = vand.u32 %v323, 4294901760
      %v542 = vsub.f32 %v323, %v541
      %v543 = vand.u32 %v542, 4294901760
      %v544 = vsub.f32 %v542, %v543
      %v545 = vand.u32 %v544, 4294901760
      %546 = vmatmul.mubr.f32.gmra.mxu0 %v545
      %v547 = vpop.f32.mrf.mxu0
      %v548 = vadd.f32 0.0, %v547
      %v549 = vpop.f32.mrf.mxu0
      %550 = vmatprep.mubr.f32.mxu0 0.0
      %v551 = vand.u32 %v326, 4294901760
      %v552 = vsub.f32 %v326, %v551
      %v553 = vand.u32 %v552, 4294901760
      %v554 = vsub.f32 %v552, %v553
      %v555 = vand.u32 %v554, 4294901760
      %556 = vmatmul.mubr.f32.gmra.mxu0 %v555
      %v557 = vpop.f32.mrf.mxu0
      %v558 = vadd.f32 0.0, %v557
      %v559 = vpop.f32.mrf.mxu0
      %560 = vdwg.mxu0
      %561 = vmatprep.subr.mxu0 0.0
      %562 = vmatpush1.msra.mxu0 0.0
      %563 = vmatprep.subr.mxu0 0.0
      %564 = vmatpush1.msra.mxu0 0.0
      %565 = vmatprep.subr.mxu0 0.0
      %566 = vmatpush1.msra.mxu0 0.0
      %567 = vmatprep.subr.mxu0 0.0
      %568 = vmatpush1.msra.mxu0 0.0
      %569 = vmatprep.subr.mxu0 0.0
      %570 = vmatpush1.msra.mxu0 0.0
      %571 = vmatprep.subr.mxu0 0.0
      %572 = vmatpush1.msra.mxu0 0.0
      %573 = vmatprep.subr.mxu0 0.0
      %574 = vmatpush1.msra.mxu0 0.0
      %575 = vmatprep.subr.mxu0 0.0
      %576 = vmatpush1.msra.mxu0 0.0
      %577 = vmatprep.subr.mxu0 0.0
      %v578 = vand.u32 %v278, 4294901760
      %v579 = vsub.f32 %v278, %v578
      %v580 = vand.u32 %v579, 4294901760
      %v581 = vsub.f32 %v579, %v580
      %v582 = vand.u32 %v581, 4294901760
      %583 = vmatpush1.msra.mxu0 %v582
      %584 = vmatprep.subr.mxu0 0.0
      %v585 = vand.u32 %v277, 4294901760
      %v586 = vsub.f32 %v277, %v585
      %v587 = vand.u32 %v586, 4294901760
      %v588 = vsub.f32 %v586, %v587
      %v589 = vand.u32 %v588, 4294901760
      %590 = vmatpush1.msra.mxu0 %v589
      %591 = vmatprep.subr.mxu0 0.0
      %v592 = vand.u32 %v276, 4294901760
      %v593 = vsub.f32 %v276, %v592
      %v594 = vand.u32 %v593, 4294901760
      %v595 = vsub.f32 %v593, %v594
      %v596 = vand.u32 %v595, 4294901760
      %597 = vmatpush1.msra.mxu0 %v596
      %598 = vmatprep.subr.mxu0 0.0
      %v599 = vand.u32 %v275, 4294901760
      %v600 = vsub.f32 %v275, %v599
      %v601 = vand.u32 %v600, 4294901760
      %v602 = vsub.f32 %v600, %v601
      %v603 = vand.u32 %v602, 4294901760
      %604 = vmatpush1.msra.mxu0 %v603
      %605 = vmatprep.subr.mxu0 0.0
      %v606 = vand.u32 %v274, 4294901760
      %v607 = vsub.f32 %v274, %v606
      %v608 = vand.u32 %v607, 4294901760
      %v609 = vsub.f32 %v607, %v608
      %v610 = vand.u32 %v609, 4294901760
      %611 = vmatpush1.msra.mxu0 %v610
      %612 = vmatprep.subr.mxu0 0.0
      %v613 = vand.u32 %v273, 4294901760
      %v614 = vsub.f32 %v273, %v613
      %v615 = vand.u32 %v614, 4294901760
      %v616 = vsub.f32 %v614, %v615
      %v617 = vand.u32 %v616, 4294901760
      %618 = vmatpush1.msra.mxu0 %v617
      %619 = vmatprep.subr.mxu0 0.0
      %v620 = vand.u32 %v272, 4294901760
      %v621 = vsub.f32 %v272, %v620
      %v622 = vand.u32 %v621, 4294901760
      %v623 = vsub.f32 %v621, %v622
      %v624 = vand.u32 %v623, 4294901760
      %625 = vmatpush1.msra.mxu0 %v624
      %626 = vmatprep.subr.mxu0 0.0
      %v627 = vand.u32 %v271, 4294901760
      %v628 = vsub.f32 %v271, %v627
      %v629 = vand.u32 %v628, 4294901760
      %v630 = vsub.f32 %v628, %v629
      %v631 = vand.u32 %v630, 4294901760
      %632 = vmatpush1.msra.mxu0 %v631
      %633 = vmatprep.subr.mxu0 0.0
      %634 = vmatpush2.msra.mxu0 0.0
      %635 = vmatprep.subr.mxu0 0.0
      %636 = vmatpush2.msra.mxu0 0.0
      %637 = vmatprep.subr.mxu0 0.0
      %638 = vmatpush2.msra.mxu0 0.0
      %639 = vmatprep.subr.mxu0 0.0
      %640 = vmatpush2.msra.mxu0 0.0
      %641 = vmatprep.subr.mxu0 0.0
      %642 = vmatpush2.msra.mxu0 0.0
      %643 = vmatprep.subr.mxu0 0.0
      %644 = vmatpush2.msra.mxu0 0.0
      %645 = vmatprep.subr.mxu0 0.0
      %646 = vmatpush2.msra.mxu0 0.0
      %647 = vmatprep.subr.mxu0 0.0
      %648 = vmatpush2.msra.mxu0 0.0
      %649 = vmatprep.subr.mxu0 0.0
      %650 = vmatpush2.msra.mxu0 0.0
      %651 = vmatprep.subr.mxu0 0.0
      %652 = vmatpush2.msra.mxu0 0.0
      %653 = vmatprep.subr.mxu0 0.0
      %654 = vmatpush2.msra.mxu0 0.0
      %655 = vmatprep.subr.mxu0 0.0
      %656 = vmatpush2.msra.mxu0 0.0
      %657 = vmatprep.subr.mxu0 0.0
      %658 = vmatpush2.msra.mxu0 0.0
      %659 = vmatprep.subr.mxu0 0.0
      %660 = vmatpush2.msra.mxu0 0.0
      %661 = vmatprep.subr.mxu0 0.0
      %662 = vmatpush2.msra.mxu0 0.0
      %663 = vmatprep.subr.mxu0 0.0
      %664 = vmatpush2.msra.mxu0 0.0
      %665 = vmatprep.mubr.f32.mxu0 0.0
      %v666 = vand.u32 %v281, 4294901760
      %667 = vmatmul.mubr.f32.gmra.mxu0 %v666
      %v668 = vpop.f32.mrf.mxu0
      %v669 = vadd.f32 %v408, %v668
      %v670 = vpop.f32.mrf.mxu0
      %671 = vmatprep.mubr.f32.mxu0 0.0
      %v672 = vand.u32 %v284, 4294901760
      %673 = vmatmul.mubr.f32.gmra.mxu0 %v672
      %v674 = vpop.f32.mrf.mxu0
      %v675 = vadd.f32 %v418, %v674
      %v676 = vpop.f32.mrf.mxu0
      %677 = vmatprep.mubr.f32.mxu0 0.0
      %v678 = vand.u32 %v287, 4294901760
      %679 = vmatmul.mubr.f32.gmra.mxu0 %v678
      %v680 = vpop.f32.mrf.mxu0
      %v681 = vadd.f32 %v428, %v680
      %v682 = vpop.f32.mrf.mxu0
      %683 = vmatprep.mubr.f32.mxu0 0.0
      %v684 = vand.u32 %v290, 4294901760
      %685 = vmatmul.mubr.f32.gmra.mxu0 %v684
      %v686 = vpop.f32.mrf.mxu0
      %v687 = vadd.f32 %v438, %v686
      %v688 = vpop.f32.mrf.mxu0
      %689 = vmatprep.mubr.f32.mxu0 0.0
      %v690 = vand.u32 %v293, 4294901760
      %691 = vmatmul.mubr.f32.gmra.mxu0 %v690
      %v692 = vpop.f32.mrf.mxu0
      %v693 = vadd.f32 %v448, %v692
      %v694 = vpop.f32.mrf.mxu0
      %695 = vmatprep.mubr.f32.mxu0 0.0
      %v696 = vand.u32 %v296, 4294901760
      %697 = vmatmul.mubr.f32.gmra.mxu0 %v696
      %v698 = vpop.f32.mrf.mxu0
      %v699 = vadd.f32 %v458, %v698
      %v700 = vpop.f32.mrf.mxu0
      %701 = vmatprep.mubr.f32.mxu0 0.0
      %v702 = vand.u32 %v299, 4294901760
      %703 = vmatmul.mubr.f32.gmra.mxu0 %v702
      %v704 = vpop.f32.mrf.mxu0
      %v705 = vadd.f32 %v468, %v704
      %v706 = vpop.f32.mrf.mxu0
      %707 = vmatprep.mubr.f32.mxu0 0.0
      %v708 = vand.u32 %v302, 4294901760
      %709 = vmatmul.mubr.f32.gmra.mxu0 %v708
      %v710 = vpop.f32.mrf.mxu0
      %v711 = vadd.f32 %v478, %v710
      %v712 = vpop.f32.mrf.mxu0
      %713 = vmatprep.mubr.f32.mxu0 0.0
      %v714 = vand.u32 %v305, 4294901760
      %715 = vmatmul.mubr.f32.gmra.mxu0 %v714
      %v716 = vpop.f32.mrf.mxu0
      %v717 = vadd.f32 %v488, %v716
      %v718 = vpop.f32.mrf.mxu0
      %719 = vmatprep.mubr.f32.mxu0 0.0
      %v720 = vand.u32 %v308, 4294901760
      %721 = vmatmul.mubr.f32.gmra.mxu0 %v720
      %v722 = vpop.f32.mrf.mxu0
      %v723 = vadd.f32 %v498, %v722
      %v724 = vpop.f32.mrf.mxu0
      %725 = vmatprep.mubr.f32.mxu0 0.0
      %v726 = vand.u32 %v311, 4294901760
      %727 = vmatmul.mubr.f32.gmra.mxu0 %v726
      %v728 = vpop.f32.mrf.mxu0
      %v729 = vadd.f32 %v508, %v728
      %v730 = vpop.f32.mrf.mxu0
      %731 = vmatprep.mubr.f32.mxu0 0.0
      %v732 = vand.u32 %v314, 4294901760
      %733 = vmatmul.mubr.f32.gmra.mxu0 %v732
      %v734 = vpop.f32.mrf.mxu0
      %v735 = vadd.f32 %v518, %v734
      %v736 = vpop.f32.mrf.mxu0
      %737 = vmatprep.mubr.f32.mxu0 0.0
      %v738 = vand.u32 %v317, 4294901760
      %739 = vmatmul.mubr.f32.gmra.mxu0 %v738
      %v740 = vpop.f32.mrf.mxu0
      %v741 = vadd.f32 %v528, %v740
      %v742 = vpop.f32.mrf.mxu0
      %743 = vmatprep.mubr.f32.mxu0 0.0
      %v744 = vand.u32 %v320, 4294901760
      %745 = vmatmul.mubr.f32.gmra.mxu0 %v744
      %v746 = vpop.f32.mrf.mxu0
      %v747 = vadd.f32 %v538, %v746
      %v748 = vpop.f32.mrf.mxu0
      %749 = vmatprep.mubr.f32.mxu0 0.0
      %v750 = vand.u32 %v323, 4294901760
      %751 = vmatmul.mubr.f32.gmra.mxu0 %v750
      %v752 = vpop.f32.mrf.mxu0
      %v753 = vadd.f32 %v548, %v752
      %v754 = vpop.f32.mrf.mxu0
      %755 = vmatprep.mubr.f32.mxu0 0.0
      %v756 = vand.u32 %v326, 4294901760
      %757 = vmatmul.mubr.f32.gmra.mxu0 %v756
      %v758 = vpop.f32.mrf.mxu0
      %v759 = vadd.f32 %v558, %v758
      %v760 = vpop.f32.mrf.mxu0
      %761 = vdwg.mxu0
      %762 = vmatprep.subr.mxu0 0.0
      %763 = vmatpush1.msra.mxu0 0.0
      %764 = vmatprep.subr.mxu0 0.0
      %765 = vmatpush1.msra.mxu0 0.0
      %766 = vmatprep.subr.mxu0 0.0
      %767 = vmatpush1.msra.mxu0 0.0
      %768 = vmatprep.subr.mxu0 0.0
      %769 = vmatpush1.msra.mxu0 0.0
      %770 = vmatprep.subr.mxu0 0.0
      %771 = vmatpush1.msra.mxu0 0.0
      %772 = vmatprep.subr.mxu0 0.0
      %773 = vmatpush1.msra.mxu0 0.0
      %774 = vmatprep.subr.mxu0 0.0
      %775 = vmatpush1.msra.mxu0 0.0
      %776 = vmatprep.subr.mxu0 0.0
      %777 = vmatpush1.msra.mxu0 0.0
      %778 = vmatprep.subr.mxu0 0.0
      %v779 = vand.u32 %v278, 4294901760
      %v780 = vsub.f32 %v278, %v779
      %781 = vmatpush1.msra.mxu0 %v780
      %782 = vmatprep.subr.mxu0 0.0
      %v783 = vand.u32 %v277, 4294901760
      %v784 = vsub.f32 %v277, %v783
      %785 = vmatpush1.msra.mxu0 %v784
      %786 = vmatprep.subr.mxu0 0.0
      %v787 = vand.u32 %v276, 4294901760
      %v788 = vsub.f32 %v276, %v787
      %789 = vmatpush1.msra.mxu0 %v788
      %790 = vmatprep.subr.mxu0 0.0
      %v791 = vand.u32 %v275, 4294901760
      %v792 = vsub.f32 %v275, %v791
      %793 = vmatpush1.msra.mxu0 %v792
      %794 = vmatprep.subr.mxu0 0.0
      %v795 = vand.u32 %v274, 4294901760
      %v796 = vsub.f32 %v274, %v795
      %797 = vmatpush1.msra.mxu0 %v796
      %798 = vmatprep.subr.mxu0 0.0
      %v799 = vand.u32 %v273, 4294901760
      %v800 = vsub.f32 %v273, %v799
      %801 = vmatpush1.msra.mxu0 %v800
      %802 = vmatprep.subr.mxu0 0.0
      %v803 = vand.u32 %v272, 4294901760
      %v804 = vsub.f32 %v272, %v803
      %805 = vmatpush1.msra.mxu0 %v804
      %806 = vmatprep.subr.mxu0 0.0
      %v807 = vand.u32 %v271, 4294901760
      %v808 = vsub.f32 %v271, %v807
      %809 = vmatpush1.msra.mxu0 %v808
      %810 = vmatprep.subr.mxu0 0.0
      %811 = vmatpush2.msra.mxu0 0.0
      %812 = vmatprep.subr.mxu0 0.0
      %813 = vmatpush2.msra.mxu0 0.0
      %814 = vmatprep.subr.mxu0 0.0
      %815 = vmatpush2.msra.mxu0 0.0
      %816 = vmatprep.subr.mxu0 0.0
      %817 = vmatpush2.msra.mxu0 0.0
      %818 = vmatprep.subr.mxu0 0.0
      %819 = vmatpush2.msra.mxu0 0.0
      %820 = vmatprep.subr.mxu0 0.0
      %821 = vmatpush2.msra.mxu0 0.0
      %822 = vmatprep.subr.mxu0 0.0
      %823 = vmatpush2.msra.mxu0 0.0
      %824 = vmatprep.subr.mxu0 0.0
      %825 = vmatpush2.msra.mxu0 0.0
      %826 = vmatprep.subr.mxu0 0.0
      %827 = vmatpush2.msra.mxu0 0.0
      %828 = vmatprep.subr.mxu0 0.0
      %829 = vmatpush2.msra.mxu0 0.0
      %830 = vmatprep.subr.mxu0 0.0
      %831 = vmatpush2.msra.mxu0 0.0
      %832 = vmatprep.subr.mxu0 0.0
      %833 = vmatpush2.msra.mxu0 0.0
      %834 = vmatprep.subr.mxu0 0.0
      %835 = vmatpush2.msra.mxu0 0.0
      %836 = vmatprep.subr.mxu0 0.0
      %837 = vmatpush2.msra.mxu0 0.0
      %838 = vmatprep.subr.mxu0 0.0
      %839 = vmatpush2.msra.mxu0 0.0
      %840 = vmatprep.subr.mxu0 0.0
      %841 = vmatpush2.msra.mxu0 0.0
      %842 = vmatprep.mubr.f32.mxu0 0.0
      %v843 = vand.u32 %v281, 4294901760
      %v844 = vsub.f32 %v281, %v843
      %845 = vmatmul.mubr.f32.gmra.mxu0 %v844
      %v846 = vpop.f32.mrf.mxu0
      %v847 = vadd.f32 %v669, %v846
      %v848 = vpop.f32.mrf.mxu0
      %849 = vmatprep.mubr.f32.mxu0 0.0
      %v850 = vand.u32 %v284, 4294901760
      %v851 = vsub.f32 %v284, %v850
      %852 = vmatmul.mubr.f32.gmra.mxu0 %v851
      %v853 = vpop.f32.mrf.mxu0
      %v854 = vadd.f32 %v675, %v853
      %v855 = vpop.f32.mrf.mxu0
      %856 = vmatprep.mubr.f32.mxu0 0.0
      %v857 = vand.u32 %v287, 4294901760
      %v858 = vsub.f32 %v287, %v857
      %859 = vmatmul.mubr.f32.gmra.mxu0 %v858
      %v860 = vpop.f32.mrf.mxu0
      %v861 = vadd.f32 %v681, %v860
      %v862 = vpop.f32.mrf.mxu0
      %863 = vmatprep.mubr.f32.mxu0 0.0
      %v864 = vand.u32 %v290, 4294901760
      %v865 = vsub.f32 %v290, %v864
      %866 = vmatmul.mubr.f32.gmra.mxu0 %v865
      %v867 = vpop.f32.mrf.mxu0
      %v868 = vadd.f32 %v687, %v867
      %v869 = vpop.f32.mrf.mxu0
      %870 = vmatprep.mubr.f32.mxu0 0.0
      %v871 = vand.u32 %v293, 4294901760
      %v872 = vsub.f32 %v293, %v871
      %873 = vmatmul.mubr.f32.gmra.mxu0 %v872
      %v874 = vpop.f32.mrf.mxu0
      %v875 = vadd.f32 %v693, %v874
      %v876 = vpop.f32.mrf.mxu0
      %877 = vmatprep.mubr.f32.mxu0 0.0
      %v878 = vand.u32 %v296, 4294901760
      %v879 = vsub.f32 %v296, %v878
      %880 = vmatmul.mubr.f32.gmra.mxu0 %v879
      %v881 = vpop.f32.mrf.mxu0
      %v882 = vadd.f32 %v699, %v881
      %v883 = vpop.f32.mrf.mxu0
      %884 = vmatprep.mubr.f32.mxu0 0.0
      %v885 = vand.u32 %v299, 4294901760
      %v886 = vsub.f32 %v299, %v885
      %887 = vmatmul.mubr.f32.gmra.mxu0 %v886
      %v888 = vpop.f32.mrf.mxu0
      %v889 = vadd.f32 %v705, %v888
      %v890 = vpop.f32.mrf.mxu0
      %891 = vmatprep.mubr.f32.mxu0 0.0
      %v892 = vand.u32 %v302, 4294901760
      %v893 = vsub.f32 %v302, %v892
      %894 = vmatmul.mubr.f32.gmra.mxu0 %v893
      %v895 = vpop.f32.mrf.mxu0
      %v896 = vadd.f32 %v711, %v895
      %v897 = vpop.f32.mrf.mxu0
      %898 = vmatprep.mubr.f32.mxu0 0.0
      %v899 = vand.u32 %v305, 4294901760
      %v900 = vsub.f32 %v305, %v899
      %901 = vmatmul.mubr.f32.gmra.mxu0 %v900
      %v902 = vpop.f32.mrf.mxu0
      %v903 = vadd.f32 %v717, %v902
      %v904 = vpop.f32.mrf.mxu0
      %905 = vmatprep.mubr.f32.mxu0 0.0
      %v906 = vand.u32 %v308, 4294901760
      %v907 = vsub.f32 %v308, %v906
      %908 = vmatmul.mubr.f32.gmra.mxu0 %v907
      %v909 = vpop.f32.mrf.mxu0
      %v910 = vadd.f32 %v723, %v909
      %v911 = vpop.f32.mrf.mxu0
      %912 = vmatprep.mubr.f32.mxu0 0.0
      %v913 = vand.u32 %v311, 4294901760
      %v914 = vsub.f32 %v311, %v913
      %915 = vmatmul.mubr.f32.gmra.mxu0 %v914
      %v916 = vpop.f32.mrf.mxu0
      %v917 = vadd.f32 %v729, %v916
      %v918 = vpop.f32.mrf.mxu0
      %919 = vmatprep.mubr.f32.mxu0 0.0
      %v920 = vand.u32 %v314, 4294901760
      %v921 = vsub.f32 %v314, %v920
      %922 = vmatmul.mubr.f32.gmra.mxu0 %v921
      %v923 = vpop.f32.mrf.mxu0
      %v924 = vadd.f32 %v735, %v923
      %v925 = vpop.f32.mrf.mxu0
      %926 = vmatprep.mubr.f32.mxu0 0.0
      %v927 = vand.u32 %v317, 4294901760
      %v928 = vsub.f32 %v317, %v927
      %929 = vmatmul.mubr.f32.gmra.mxu0 %v928
      %v930 = vpop.f32.mrf.mxu0
      %v931 = vadd.f32 %v741, %v930
      %v932 = vpop.f32.mrf.mxu0
      %933 = vmatprep.mubr.f32.mxu0 0.0
      %v934 = vand.u32 %v320, 4294901760
      %v935 = vsub.f32 %v320, %v934
      %936 = vmatmul.mubr.f32.gmra.mxu0 %v935
      %v937 = vpop.f32.mrf.mxu0
      %v938 = vadd.f32 %v747, %v937
      %v939 = vpop.f32.mrf.mxu0
      %940 = vmatprep.mubr.f32.mxu0 0.0
      %v941 = vand.u32 %v323, 4294901760
      %v942 = vsub.f32 %v323, %v941
      %943 = vmatmul.mubr.f32.gmra.mxu0 %v942
      %v944 = vpop.f32.mrf.mxu0
      %v945 = vadd.f32 %v753, %v944
      %v946 = vpop.f32.mrf.mxu0
      %947 = vmatprep.mubr.f32.mxu0 0.0
      %v948 = vand.u32 %v326, 4294901760
      %v949 = vsub.f32 %v326, %v948
      %950 = vmatmul.mubr.f32.gmra.mxu0 %v949
      %v951 = vpop.f32.mrf.mxu0
      %v952 = vadd.f32 %v759, %v951
      %v953 = vpop.f32.mrf.mxu0
      %954 = vdwg.mxu0
      %955 = vmatprep.subr.mxu0 0.0
      %956 = vmatpush1.msra.mxu0 0.0
      %957 = vmatprep.subr.mxu0 0.0
      %958 = vmatpush1.msra.mxu0 0.0
      %959 = vmatprep.subr.mxu0 0.0
      %960 = vmatpush1.msra.mxu0 0.0
      %961 = vmatprep.subr.mxu0 0.0
      %962 = vmatpush1.msra.mxu0 0.0
      %963 = vmatprep.subr.mxu0 0.0
      %964 = vmatpush1.msra.mxu0 0.0
      %965 = vmatprep.subr.mxu0 0.0
      %966 = vmatpush1.msra.mxu0 0.0
      %967 = vmatprep.subr.mxu0 0.0
      %968 = vmatpush1.msra.mxu0 0.0
      %969 = vmatprep.subr.mxu0 0.0
      %970 = vmatpush1.msra.mxu0 0.0
      %971 = vmatprep.subr.mxu0 0.0
      %v972 = vand.u32 %v278, 4294901760
      %973 = vmatpush1.msra.mxu0 %v972
      %974 = vmatprep.subr.mxu0 0.0
      %v975 = vand.u32 %v277, 4294901760
      %976 = vmatpush1.msra.mxu0 %v975
      %977 = vmatprep.subr.mxu0 0.0
      %v978 = vand.u32 %v276, 4294901760
      %979 = vmatpush1.msra.mxu0 %v978
      %980 = vmatprep.subr.mxu0 0.0
      %v981 = vand.u32 %v275, 4294901760
      %982 = vmatpush1.msra.mxu0 %v981
      %983 = vmatprep.subr.mxu0 0.0
      %v984 = vand.u32 %v274, 4294901760
      %985 = vmatpush1.msra.mxu0 %v984
      %986 = vmatprep.subr.mxu0 0.0
      %v987 = vand.u32 %v273, 4294901760
      %988 = vmatpush1.msra.mxu0 %v987
      %989 = vmatprep.subr.mxu0 0.0
      %v990 = vand.u32 %v272, 4294901760
      %991 = vmatpush1.msra.mxu0 %v990
      %992 = vmatprep.subr.mxu0 0.0
      %v993 = vand.u32 %v271, 4294901760
      %994 = vmatpush1.msra.mxu0 %v993
      %995 = vmatprep.subr.mxu0 0.0
      %996 = vmatpush2.msra.mxu0 0.0
      %997 = vmatprep.subr.mxu0 0.0
      %998 = vmatpush2.msra.mxu0 0.0
      %999 = vmatprep.subr.mxu0 0.0
      %1000 = vmatpush2.msra.mxu0 0.0
      %1001 = vmatprep.subr.mxu0 0.0
      %1002 = vmatpush2.msra.mxu0 0.0
      %1003 = vmatprep.subr.mxu0 0.0
      %1004 = vmatpush2.msra.mxu0 0.0
      %1005 = vmatprep.subr.mxu0 0.0
      %1006 = vmatpush2.msra.mxu0 0.0
      %1007 = vmatprep.subr.mxu0 0.0
      %1008 = vmatpush2.msra.mxu0 0.0
      %1009 = vmatprep.subr.mxu0 0.0
      %1010 = vmatpush2.msra.mxu0 0.0
      %1011 = vmatprep.subr.mxu0 0.0
      %1012 = vmatpush2.msra.mxu0 0.0
      %1013 = vmatprep.subr.mxu0 0.0
      %1014 = vmatpush2.msra.mxu0 0.0
      %1015 = vmatprep.subr.mxu0 0.0
      %1016 = vmatpush2.msra.mxu0 0.0
      %1017 = vmatprep.subr.mxu0 0.0
      %1018 = vmatpush2.msra.mxu0 0.0
      %1019 = vmatprep.subr.mxu0 0.0
      %1020 = vmatpush2.msra.mxu0 0.0
      %1021 = vmatprep.subr.mxu0 0.0
      %1022 = vmatpush2.msra.mxu0 0.0
      %1023 = vmatprep.subr.mxu0 0.0
      %1024 = vmatpush2.msra.mxu0 0.0
      %1025 = vmatprep.subr.mxu0 0.0
      %1026 = vmatpush2.msra.mxu0 0.0
      %1027 = vmatprep.mubr.f32.mxu0 0.0
      %v1028 = vand.u32 %v281, 4294901760
      %v1029 = vsub.f32 %v281, %v1028
      %v1030 = vand.u32 %v1029, 4294901760
      %1031 = vmatmul.mubr.f32.gmra.mxu0 %v1030
      %v1032 = vpop.f32.mrf.mxu0
      %v1033 = vadd.f32 %v847, %v1032
      %v1034 = vpop.f32.mrf.mxu0
      %1035 = vmatprep.mubr.f32.mxu0 0.0
      %v1036 = vand.u32 %v284, 4294901760
      %v1037 = vsub.f32 %v284, %v1036
      %v1038 = vand.u32 %v1037, 4294901760
      %1039 = vmatmul.mubr.f32.gmra.mxu0 %v1038
      %v1040 = vpop.f32.mrf.mxu0
      %v1041 = vadd.f32 %v854, %v1040
      %v1042 = vpop.f32.mrf.mxu0
      %1043 = vmatprep.mubr.f32.mxu0 0.0
      %v1044 = vand.u32 %v287, 4294901760
      %v1045 = vsub.f32 %v287, %v1044
      %v1046 = vand.u32 %v1045, 4294901760
      %1047 = vmatmul.mubr.f32.gmra.mxu0 %v1046
      %v1048 = vpop.f32.mrf.mxu0
      %v1049 = vadd.f32 %v861, %v1048
      %v1050 = vpop.f32.mrf.mxu0
      %1051 = vmatprep.mubr.f32.mxu0 0.0
      %v1052 = vand.u32 %v290, 4294901760
      %v1053 = vsub.f32 %v290, %v1052
      %v1054 = vand.u32 %v1053, 4294901760
      %1055 = vmatmul.mubr.f32.gmra.mxu0 %v1054
      %v1056 = vpop.f32.mrf.mxu0
      %v1057 = vadd.f32 %v868, %v1056
      %v1058 = vpop.f32.mrf.mxu0
      %1059 = vmatprep.mubr.f32.mxu0 0.0
      %v1060 = vand.u32 %v293, 4294901760
      %v1061 = vsub.f32 %v293, %v1060
      %v1062 = vand.u32 %v1061, 4294901760
      %1063 = vmatmul.mubr.f32.gmra.mxu0 %v1062
      %v1064 = vpop.f32.mrf.mxu0
      %v1065 = vadd.f32 %v875, %v1064
      %v1066 = vpop.f32.mrf.mxu0
      %1067 = vmatprep.mubr.f32.mxu0 0.0
      %v1068 = vand.u32 %v296, 4294901760
      %v1069 = vsub.f32 %v296, %v1068
      %v1070 = vand.u32 %v1069, 4294901760
      %1071 = vmatmul.mubr.f32.gmra.mxu0 %v1070
      %v1072 = vpop.f32.mrf.mxu0
      %v1073 = vadd.f32 %v882, %v1072
      %v1074 = vpop.f32.mrf.mxu0
      %1075 = vmatprep.mubr.f32.mxu0 0.0
      %v1076 = vand.u32 %v299, 4294901760
      %v1077 = vsub.f32 %v299, %v1076
      %v1078 = vand.u32 %v1077, 4294901760
      %1079 = vmatmul.mubr.f32.gmra.mxu0 %v1078
      %v1080 = vpop.f32.mrf.mxu0
      %v1081 = vadd.f32 %v889, %v1080
      %v1082 = vpop.f32.mrf.mxu0
      %1083 = vmatprep.mubr.f32.mxu0 0.0
      %v1084 = vand.u32 %v302, 4294901760
      %v1085 = vsub.f32 %v302, %v1084
      %v1086 = vand.u32 %v1085, 4294901760
      %1087 = vmatmul.mubr.f32.gmra.mxu0 %v1086
      %v1088 = vpop.f32.mrf.mxu0
      %v1089 = vadd.f32 %v896, %v1088
      %v1090 = vpop.f32.mrf.mxu0
      %1091 = vmatprep.mubr.f32.mxu0 0.0
      %v1092 = vand.u32 %v305, 4294901760
      %v1093 = vsub.f32 %v305, %v1092
      %v1094 = vand.u32 %v1093, 4294901760
      %1095 = vmatmul.mubr.f32.gmra.mxu0 %v1094
      %v1096 = vpop.f32.mrf.mxu0
      %v1097 = vadd.f32 %v903, %v1096
      %v1098 = vpop.f32.mrf.mxu0
      %1099 = vmatprep.mubr.f32.mxu0 0.0
      %v1100 = vand.u32 %v308, 4294901760
      %v1101 = vsub.f32 %v308, %v1100
      %v1102 = vand.u32 %v1101, 4294901760
      %1103 = vmatmul.mubr.f32.gmra.mxu0 %v1102
      %v1104 = vpop.f32.mrf.mxu0
      %v1105 = vadd.f32 %v910, %v1104
      %v1106 = vpop.f32.mrf.mxu0
      %1107 = vmatprep.mubr.f32.mxu0 0.0
      %v1108 = vand.u32 %v311, 4294901760
      %v1109 = vsub.f32 %v311, %v1108
      %v1110 = vand.u32 %v1109, 4294901760
      %1111 = vmatmul.mubr.f32.gmra.mxu0 %v1110
      %v1112 = vpop.f32.mrf.mxu0
      %v1113 = vadd.f32 %v917, %v1112
      %v1114 = vpop.f32.mrf.mxu0
      %1115 = vmatprep.mubr.f32.mxu0 0.0
      %v1116 = vand.u32 %v314, 4294901760
      %v1117 = vsub.f32 %v314, %v1116
      %v1118 = vand.u32 %v1117, 4294901760
      %1119 = vmatmul.mubr.f32.gmra.mxu0 %v1118
      %v1120 = vpop.f32.mrf.mxu0
      %v1121 = vadd.f32 %v924, %v1120
      %v1122 = vpop.f32.mrf.mxu0
      %1123 = vmatprep.mubr.f32.mxu0 0.0
      %v1124 = vand.u32 %v317, 4294901760
      %v1125 = vsub.f32 %v317, %v1124
      %v1126 = vand.u32 %v1125, 4294901760
      %1127 = vmatmul.mubr.f32.gmra.mxu0 %v1126
      %v1128 = vpop.f32.mrf.mxu0
      %v1129 = vadd.f32 %v931, %v1128
      %v1130 = vpop.f32.mrf.mxu0
      %1131 = vmatprep.mubr.f32.mxu0 0.0
      %v1132 = vand.u32 %v320, 4294901760
      %v1133 = vsub.f32 %v320, %v1132
      %v1134 = vand.u32 %v1133, 4294901760
      %1135 = vmatmul.mubr.f32.gmra.mxu0 %v1134
      %v1136 = vpop.f32.mrf.mxu0
      %v1137 = vadd.f32 %v938, %v1136
      %v1138 = vpop.f32.mrf.mxu0
      %1139 = vmatprep.mubr.f32.mxu0 0.0
      %v1140 = vand.u32 %v323, 4294901760
      %v1141 = vsub.f32 %v323, %v1140
      %v1142 = vand.u32 %v1141, 4294901760
      %1143 = vmatmul.mubr.f32.gmra.mxu0 %v1142
      %v1144 = vpop.f32.mrf.mxu0
      %v1145 = vadd.f32 %v945, %v1144
      %v1146 = vpop.f32.mrf.mxu0
      %1147 = vmatprep.mubr.f32.mxu0 0.0
      %v1148 = vand.u32 %v326, 4294901760
      %v1149 = vsub.f32 %v326, %v1148
      %v1150 = vand.u32 %v1149, 4294901760
      %1151 = vmatmul.mubr.f32.gmra.mxu0 %v1150
      %v1152 = vpop.f32.mrf.mxu0
      %v1153 = vadd.f32 %v952, %v1152
      %v1154 = vpop.f32.mrf.mxu0
      %1155 = vdwg.mxu0
      %1156 = vmatprep.subr.mxu0 0.0
      %1157 = vmatpush1.msra.mxu0 0.0
      %1158 = vmatprep.subr.mxu0 0.0
      %1159 = vmatpush1.msra.mxu0 0.0
      %1160 = vmatprep.subr.mxu0 0.0
      %1161 = vmatpush1.msra.mxu0 0.0
      %1162 = vmatprep.subr.mxu0 0.0
      %1163 = vmatpush1.msra.mxu0 0.0
      %1164 = vmatprep.subr.mxu0 0.0
      %1165 = vmatpush1.msra.mxu0 0.0
      %1166 = vmatprep.subr.mxu0 0.0
      %1167 = vmatpush1.msra.mxu0 0.0
      %1168 = vmatprep.subr.mxu0 0.0
      %1169 = vmatpush1.msra.mxu0 0.0
      %1170 = vmatprep.subr.mxu0 0.0
      %1171 = vmatpush1.msra.mxu0 0.0
      %1172 = vmatprep.subr.mxu0 0.0
      %v1173 = vand.u32 %v278, 4294901760
      %v1174 = vsub.f32 %v278, %v1173
      %v1175 = vand.u32 %v1174, 4294901760
      %1176 = vmatpush1.msra.mxu0 %v1175
      %1177 = vmatprep.subr.mxu0 0.0
      %v1178 = vand.u32 %v277, 4294901760
      %v1179 = vsub.f32 %v277, %v1178
      %v1180 = vand.u32 %v1179, 4294901760
      %1181 = vmatpush1.msra.mxu0 %v1180
      %1182 = vmatprep.subr.mxu0 0.0
      %v1183 = vand.u32 %v276, 4294901760
      %v1184 = vsub.f32 %v276, %v1183
      %v1185 = vand.u32 %v1184, 4294901760
      %1186 = vmatpush1.msra.mxu0 %v1185
      %1187 = vmatprep.subr.mxu0 0.0
      %v1188 = vand.u32 %v275, 4294901760
      %v1189 = vsub.f32 %v275, %v1188
      %v1190 = vand.u32 %v1189, 4294901760
      %1191 = vmatpush1.msra.mxu0 %v1190
      %1192 = vmatprep.subr.mxu0 0.0
      %v1193 = vand.u32 %v274, 4294901760
      %v1194 = vsub.f32 %v274, %v1193
      %v1195 = vand.u32 %v1194, 4294901760
      %1196 = vmatpush1.msra.mxu0 %v1195
      %1197 = vmatprep.subr.mxu0 0.0
      %v1198 = vand.u32 %v273, 4294901760
      %v1199 = vsub.f32 %v273, %v1198
      %v1200 = vand.u32 %v1199, 4294901760
      %1201 = vmatpush1.msra.mxu0 %v1200
      %1202 = vmatprep.subr.mxu0 0.0
      %v1203 = vand.u32 %v272, 4294901760
      %v1204 = vsub.f32 %v272, %v1203
      %v1205 = vand.u32 %v1204, 4294901760
      %1206 = vmatpush1.msra.mxu0 %v1205
      %1207 = vmatprep.subr.mxu0 0.0
      %v1208 = vand.u32 %v271, 4294901760
      %v1209 = vsub.f32 %v271, %v1208
      %v1210 = vand.u32 %v1209, 4294901760
      %1211 = vmatpush1.msra.mxu0 %v1210
      %1212 = vmatprep.subr.mxu0 0.0
      %1213 = vmatpush2.msra.mxu0 0.0
      %1214 = vmatprep.subr.mxu0 0.0
      %1215 = vmatpush2.msra.mxu0 0.0
      %1216 = vmatprep.subr.mxu0 0.0
      %1217 = vmatpush2.msra.mxu0 0.0
      %1218 = vmatprep.subr.mxu0 0.0
      %1219 = vmatpush2.msra.mxu0 0.0
      %1220 = vmatprep.subr.mxu0 0.0
      %1221 = vmatpush2.msra.mxu0 0.0
      %1222 = vmatprep.subr.mxu0 0.0
      %1223 = vmatpush2.msra.mxu0 0.0
      %1224 = vmatprep.subr.mxu0 0.0
      %1225 = vmatpush2.msra.mxu0 0.0
      %1226 = vmatprep.subr.mxu0 0.0
      %1227 = vmatpush2.msra.mxu0 0.0
      %1228 = vmatprep.subr.mxu0 0.0
      %1229 = vmatpush2.msra.mxu0 0.0
      %1230 = vmatprep.subr.mxu0 0.0
      %1231 = vmatpush2.msra.mxu0 0.0
      %1232 = vmatprep.subr.mxu0 0.0
      %1233 = vmatpush2.msra.mxu0 0.0
      %1234 = vmatprep.subr.mxu0 0.0
      %1235 = vmatpush2.msra.mxu0 0.0
      %1236 = vmatprep.subr.mxu0 0.0
      %1237 = vmatpush2.msra.mxu0 0.0
      %1238 = vmatprep.subr.mxu0 0.0
      %1239 = vmatpush2.msra.mxu0 0.0
      %1240 = vmatprep.subr.mxu0 0.0
      %1241 = vmatpush2.msra.mxu0 0.0
      %1242 = vmatprep.subr.mxu0 0.0
      %1243 = vmatpush2.msra.mxu0 0.0
      %1244 = vmatprep.mubr.f32.mxu0 0.0
      %v1245 = vand.u32 %v281, 4294901760
      %1246 = vmatmul.mubr.f32.gmra.mxu0 %v1245
      %v1247 = vpop.f32.mrf.mxu0
      %v1248 = vadd.f32 %v1033, %v1247
      %v1249 = vpop.f32.mrf.mxu0
      %1250 = vmatprep.mubr.f32.mxu0 0.0
      %v1251 = vand.u32 %v284, 4294901760
      %1252 = vmatmul.mubr.f32.gmra.mxu0 %v1251
      %v1253 = vpop.f32.mrf.mxu0
      %v1254 = vadd.f32 %v1041, %v1253
      %v1255 = vpop.f32.mrf.mxu0
      %1256 = vmatprep.mubr.f32.mxu0 0.0
      %v1257 = vand.u32 %v287, 4294901760
      %1258 = vmatmul.mubr.f32.gmra.mxu0 %v1257
      %v1259 = vpop.f32.mrf.mxu0
      %v1260 = vadd.f32 %v1049, %v1259
      %v1261 = vpop.f32.mrf.mxu0
      %1262 = vmatprep.mubr.f32.mxu0 0.0
      %v1263 = vand.u32 %v290, 4294901760
      %1264 = vmatmul.mubr.f32.gmra.mxu0 %v1263
      %v1265 = vpop.f32.mrf.mxu0
      %v1266 = vadd.f32 %v1057, %v1265
      %v1267 = vpop.f32.mrf.mxu0
      %1268 = vmatprep.mubr.f32.mxu0 0.0
      %v1269 = vand.u32 %v293, 4294901760
      %1270 = vmatmul.mubr.f32.gmra.mxu0 %v1269
      %v1271 = vpop.f32.mrf.mxu0
      %v1272 = vadd.f32 %v1065, %v1271
      %v1273 = vpop.f32.mrf.mxu0
      %1274 = vmatprep.mubr.f32.mxu0 0.0
      %v1275 = vand.u32 %v296, 4294901760
      %1276 = vmatmul.mubr.f32.gmra.mxu0 %v1275
      %v1277 = vpop.f32.mrf.mxu0
      %v1278 = vadd.f32 %v1073, %v1277
      %v1279 = vpop.f32.mrf.mxu0
      %1280 = vmatprep.mubr.f32.mxu0 0.0
      %v1281 = vand.u32 %v299, 4294901760
      %1282 = vmatmul.mubr.f32.gmra.mxu0 %v1281
      %v1283 = vpop.f32.mrf.mxu0
      %v1284 = vadd.f32 %v1081, %v1283
      %v1285 = vpop.f32.mrf.mxu0
      %1286 = vmatprep.mubr.f32.mxu0 0.0
      %v1287 = vand.u32 %v302, 4294901760
      %1288 = vmatmul.mubr.f32.gmra.mxu0 %v1287
      %v1289 = vpop.f32.mrf.mxu0
      %v1290 = vadd.f32 %v1089, %v1289
      %v1291 = vpop.f32.mrf.mxu0
      %1292 = vmatprep.mubr.f32.mxu0 0.0
      %v1293 = vand.u32 %v305, 4294901760
      %1294 = vmatmul.mubr.f32.gmra.mxu0 %v1293
      %v1295 = vpop.f32.mrf.mxu0
      %v1296 = vadd.f32 %v1097, %v1295
      %v1297 = vpop.f32.mrf.mxu0
      %1298 = vmatprep.mubr.f32.mxu0 0.0
      %v1299 = vand.u32 %v308, 4294901760
      %1300 = vmatmul.mubr.f32.gmra.mxu0 %v1299
      %v1301 = vpop.f32.mrf.mxu0
      %v1302 = vadd.f32 %v1105, %v1301
      %v1303 = vpop.f32.mrf.mxu0
      %1304 = vmatprep.mubr.f32.mxu0 0.0
      %v1305 = vand.u32 %v311, 4294901760
      %1306 = vmatmul.mubr.f32.gmra.mxu0 %v1305
      %v1307 = vpop.f32.mrf.mxu0
      %v1308 = vadd.f32 %v1113, %v1307
      %v1309 = vpop.f32.mrf.mxu0
      %1310 = vmatprep.mubr.f32.mxu0 0.0
      %v1311 = vand.u32 %v314, 4294901760
      %1312 = vmatmul.mubr.f32.gmra.mxu0 %v1311
      %v1313 = vpop.f32.mrf.mxu0
      %v1314 = vadd.f32 %v1121, %v1313
      %v1315 = vpop.f32.mrf.mxu0
      %1316 = vmatprep.mubr.f32.mxu0 0.0
      %v1317 = vand.u32 %v317, 4294901760
      %1318 = vmatmul.mubr.f32.gmra.mxu0 %v1317
      %v1319 = vpop.f32.mrf.mxu0
      %v1320 = vadd.f32 %v1129, %v1319
      %v1321 = vpop.f32.mrf.mxu0
      %1322 = vmatprep.mubr.f32.mxu0 0.0
      %v1323 = vand.u32 %v320, 4294901760
      %1324 = vmatmul.mubr.f32.gmra.mxu0 %v1323
      %v1325 = vpop.f32.mrf.mxu0
      %v1326 = vadd.f32 %v1137, %v1325
      %v1327 = vpop.f32.mrf.mxu0
      %1328 = vmatprep.mubr.f32.mxu0 0.0
      %v1329 = vand.u32 %v323, 4294901760
      %1330 = vmatmul.mubr.f32.gmra.mxu0 %v1329
      %v1331 = vpop.f32.mrf.mxu0
      %v1332 = vadd.f32 %v1145, %v1331
      %v1333 = vpop.f32.mrf.mxu0
      %1334 = vmatprep.mubr.f32.mxu0 0.0
      %v1335 = vand.u32 %v326, 4294901760
      %1336 = vmatmul.mubr.f32.gmra.mxu0 %v1335
      %v1337 = vpop.f32.mrf.mxu0
      %v1338 = vadd.f32 %v1153, %v1337
      %v1339 = vpop.f32.mrf.mxu0
      %1340 = vdwg.mxu0
      %1341 = vmatprep.subr.mxu0 0.0
      %1342 = vmatpush1.msra.mxu0 0.0
      %1343 = vmatprep.subr.mxu0 0.0
      %1344 = vmatpush1.msra.mxu0 0.0
      %1345 = vmatprep.subr.mxu0 0.0
      %1346 = vmatpush1.msra.mxu0 0.0
      %1347 = vmatprep.subr.mxu0 0.0
      %1348 = vmatpush1.msra.mxu0 0.0
      %1349 = vmatprep.subr.mxu0 0.0
      %1350 = vmatpush1.msra.mxu0 0.0
      %1351 = vmatprep.subr.mxu0 0.0
      %1352 = vmatpush1.msra.mxu0 0.0
      %1353 = vmatprep.subr.mxu0 0.0
      %1354 = vmatpush1.msra.mxu0 0.0
      %1355 = vmatprep.subr.mxu0 0.0
      %1356 = vmatpush1.msra.mxu0 0.0
      %1357 = vmatprep.subr.mxu0 0.0
      %v1358 = vand.u32 %v278, 4294901760
      %1359 = vmatpush1.msra.mxu0 %v1358
      %1360 = vmatprep.subr.mxu0 0.0
      %v1361 = vand.u32 %v277, 4294901760
      %1362 = vmatpush1.msra.mxu0 %v1361
      %1363 = vmatprep.subr.mxu0 0.0
      %v1364 = vand.u32 %v276, 4294901760
      %1365 = vmatpush1.msra.mxu0 %v1364
      %1366 = vmatprep.subr.mxu0 0.0
      %v1367 = vand.u32 %v275, 4294901760
      %1368 = vmatpush1.msra.mxu0 %v1367
      %1369 = vmatprep.subr.mxu0 0.0
      %v1370 = vand.u32 %v274, 4294901760
      %1371 = vmatpush1.msra.mxu0 %v1370
      %1372 = vmatprep.subr.mxu0 0.0
      %v1373 = vand.u32 %v273, 4294901760
      %1374 = vmatpush1.msra.mxu0 %v1373
      %1375 = vmatprep.subr.mxu0 0.0
      %v1376 = vand.u32 %v272, 4294901760
      %1377 = vmatpush1.msra.mxu0 %v1376
      %1378 = vmatprep.subr.mxu0 0.0
      %v1379 = vand.u32 %v271, 4294901760
      %1380 = vmatpush1.msra.mxu0 %v1379
      %1381 = vmatprep.subr.mxu0 0.0
      %1382 = vmatpush2.msra.mxu0 0.0
      %1383 = vmatprep.subr.mxu0 0.0
      %1384 = vmatpush2.msra.mxu0 0.0
      %1385 = vmatprep.subr.mxu0 0.0
      %1386 = vmatpush2.msra.mxu0 0.0
      %1387 = vmatprep.subr.mxu0 0.0
      %1388 = vmatpush2.msra.mxu0 0.0
      %1389 = vmatprep.subr.mxu0 0.0
      %1390 = vmatpush2.msra.mxu0 0.0
      %1391 = vmatprep.subr.mxu0 0.0
      %1392 = vmatpush2.msra.mxu0 0.0
      %1393 = vmatprep.subr.mxu0 0.0
      %1394 = vmatpush2.msra.mxu0 0.0
      %1395 = vmatprep.subr.mxu0 0.0
      %1396 = vmatpush2.msra.mxu0 0.0
      %1397 = vmatprep.subr.mxu0 0.0
      %1398 = vmatpush2.msra.mxu0 0.0
      %1399 = vmatprep.subr.mxu0 0.0
      %1400 = vmatpush2.msra.mxu0 0.0
      %1401 = vmatprep.subr.mxu0 0.0
      %1402 = vmatpush2.msra.mxu0 0.0
      %1403 = vmatprep.subr.mxu0 0.0
      %1404 = vmatpush2.msra.mxu0 0.0
      %1405 = vmatprep.subr.mxu0 0.0
      %1406 = vmatpush2.msra.mxu0 0.0
      %1407 = vmatprep.subr.mxu0 0.0
      %1408 = vmatpush2.msra.mxu0 0.0
      %1409 = vmatprep.subr.mxu0 0.0
      %1410 = vmatpush2.msra.mxu0 0.0
      %1411 = vmatprep.subr.mxu0 0.0
      %1412 = vmatpush2.msra.mxu0 0.0
      %1413 = vmatprep.mubr.f32.mxu0 0.0
      %v1414 = vand.u32 %v281, 4294901760
      %1415 = vmatmul.mubr.f32.gmra.mxu0 %v1414
      %v1416 = vpop.f32.mrf.mxu0
      %v1417 = vadd.f32 %v1248, %v1416
      %v1418 = vpop.f32.mrf.mxu0
      %1419 = vmatprep.mubr.f32.mxu0 0.0
      %v1420 = vand.u32 %v284, 4294901760
      %1421 = vmatmul.mubr.f32.gmra.mxu0 %v1420
      %v1422 = vpop.f32.mrf.mxu0
      %v1423 = vadd.f32 %v1254, %v1422
      %v1424 = vpop.f32.mrf.mxu0
      %1425 = vmatprep.mubr.f32.mxu0 0.0
      %v1426 = vand.u32 %v287, 4294901760
      %1427 = vmatmul.mubr.f32.gmra.mxu0 %v1426
      %v1428 = vpop.f32.mrf.mxu0
      %v1429 = vadd.f32 %v1260, %v1428
      %v1430 = vpop.f32.mrf.mxu0
      %1431 = vmatprep.mubr.f32.mxu0 0.0
      %v1432 = vand.u32 %v290, 4294901760
      %1433 = vmatmul.mubr.f32.gmra.mxu0 %v1432
      %v1434 = vpop.f32.mrf.mxu0
      %v1435 = vadd.f32 %v1266, %v1434
      %v1436 = vpop.f32.mrf.mxu0
      %1437 = vmatprep.mubr.f32.mxu0 0.0
      %v1438 = vand.u32 %v293, 4294901760
      %1439 = vmatmul.mubr.f32.gmra.mxu0 %v1438
      %v1440 = vpop.f32.mrf.mxu0
      %v1441 = vadd.f32 %v1272, %v1440
      %v1442 = vpop.f32.mrf.mxu0
      %1443 = vmatprep.mubr.f32.mxu0 0.0
      %v1444 = vand.u32 %v296, 4294901760
      %1445 = vmatmul.mubr.f32.gmra.mxu0 %v1444
      %v1446 = vpop.f32.mrf.mxu0
      %v1447 = vadd.f32 %v1278, %v1446
      %v1448 = vpop.f32.mrf.mxu0
      %1449 = vmatprep.mubr.f32.mxu0 0.0
      %v1450 = vand.u32 %v299, 4294901760
      %1451 = vmatmul.mubr.f32.gmra.mxu0 %v1450
      %v1452 = vpop.f32.mrf.mxu0
      %v1453 = vadd.f32 %v1284, %v1452
      %v1454 = vpop.f32.mrf.mxu0
      %1455 = vmatprep.mubr.f32.mxu0 0.0
      %v1456 = vand.u32 %v302, 4294901760
      %1457 = vmatmul.mubr.f32.gmra.mxu0 %v1456
      %v1458 = vpop.f32.mrf.mxu0
      %v1459 = vadd.f32 %v1290, %v1458
      %v1460 = vpop.f32.mrf.mxu0
      %1461 = vmatprep.mubr.f32.mxu0 0.0
      %v1462 = vand.u32 %v305, 4294901760
      %1463 = vmatmul.mubr.f32.gmra.mxu0 %v1462
      %v1464 = vpop.f32.mrf.mxu0
      %v1465 = vadd.f32 %v1296, %v1464
      %v1466 = vpop.f32.mrf.mxu0
      %1467 = vmatprep.mubr.f32.mxu0 0.0
      %v1468 = vand.u32 %v308, 4294901760
      %1469 = vmatmul.mubr.f32.gmra.mxu0 %v1468
      %v1470 = vpop.f32.mrf.mxu0
      %v1471 = vadd.f32 %v1302, %v1470
      %v1472 = vpop.f32.mrf.mxu0
      %1473 = vmatprep.mubr.f32.mxu0 0.0
      %v1474 = vand.u32 %v311, 4294901760
      %1475 = vmatmul.mubr.f32.gmra.mxu0 %v1474
      %v1476 = vpop.f32.mrf.mxu0
      %v1477 = vadd.f32 %v1308, %v1476
      %v1478 = vpop.f32.mrf.mxu0
      %1479 = vmatprep.mubr.f32.mxu0 0.0
      %v1480 = vand.u32 %v314, 4294901760
      %1481 = vmatmul.mubr.f32.gmra.mxu0 %v1480
      %v1482 = vpop.f32.mrf.mxu0
      %v1483 = vadd.f32 %v1314, %v1482
      %v1484 = vpop.f32.mrf.mxu0
      %1485 = vmatprep.mubr.f32.mxu0 0.0
      %v1486 = vand.u32 %v317, 4294901760
      %1487 = vmatmul.mubr.f32.gmra.mxu0 %v1486
      %v1488 = vpop.f32.mrf.mxu0
      %v1489 = vadd.f32 %v1320, %v1488
      %v1490 = vpop.f32.mrf.mxu0
      %1491 = vmatprep.mubr.f32.mxu0 0.0
      %v1492 = vand.u32 %v320, 4294901760
      %1493 = vmatmul.mubr.f32.gmra.mxu0 %v1492
      %v1494 = vpop.f32.mrf.mxu0
      %v1495 = vadd.f32 %v1326, %v1494
      %v1496 = vpop.f32.mrf.mxu0
      %1497 = vmatprep.mubr.f32.mxu0 0.0
      %v1498 = vand.u32 %v323, 4294901760
      %1499 = vmatmul.mubr.f32.gmra.mxu0 %v1498
      %v1500 = vpop.f32.mrf.mxu0
      %v1501 = vadd.f32 %v1332, %v1500
      %v1502 = vpop.f32.mrf.mxu0
      %1503 = vmatprep.mubr.f32.mxu0 0.0
      %v1504 = vand.u32 %v326, 4294901760
      %1505 = vmatmul.mubr.f32.gmra.mxu0 %v1504
      %v1506 = vpop.f32.mrf.mxu0
      %v1507 = vadd.f32 %v1338, %v1506
      %v1508 = vpop.f32.mrf.mxu0
      %1509 = vdwg.mxu0
      %v1510 = vadd.f32 %v239, %v1417
      %v1511 = vadd.f32 %v240, %v1423
      %v1512 = vadd.f32 %v241, %v1429
      %v1513 = vadd.f32 %v242, %v1435
      %v1514 = vadd.f32 %v243, %v1441
      %v1515 = vadd.f32 %v244, %v1447
      %v1516 = vadd.f32 %v245, %v1453
      %v1517 = vadd.f32 %v246, %v1459
      %v1518 = vadd.f32 %v247, %v1465
      %v1519 = vadd.f32 %v248, %v1471
      %v1520 = vadd.f32 %v249, %v1477
      %v1521 = vadd.f32 %v250, %v1483
      %v1522 = vadd.f32 %v251, %v1489
      %v1523 = vadd.f32 %v252, %v1495
      %v1524 = vadd.f32 %v253, %v1501
      %v1525 = vadd.f32 %v254, %v1507
      %vm1526 = vcmask 261120
      %1527 = vst.msk [vmem:[#allocation2] sm:$0xff] %vm1526, %v1510
      %1528 = vst.msk [vmem:[#allocation2 + $0x8] sm:$0xff] %vm1526, %v1511
      %1529 = vst.msk [vmem:[#allocation2 + $0x10] sm:$0xff] %vm1526, %v1512
      %1530 = vst.msk [vmem:[#allocation2 + $0x18] sm:$0xff] %vm1526, %v1513
      %1531 = vst.msk [vmem:[#allocation2 + $0x20] sm:$0xff] %vm1526, %v1514
      %1532 = vst.msk [vmem:[#allocation2 + $0x28] sm:$0xff] %vm1526, %v1515
      %1533 = vst.msk [vmem:[#allocation2 + $0x30] sm:$0xff] %vm1526, %v1516
      %1534 = vst.msk [vmem:[#allocation2 + $0x38] sm:$0xff] %vm1526, %v1517
      %1535 = vst.msk [vmem:[#allocation2 + $0x40] sm:$0xff] %vm1526, %v1518
      %1536 = vst.msk [vmem:[#allocation2 + $0x48] sm:$0xff] %vm1526, %v1519
      %1537 = vst.msk [vmem:[#allocation2 + $0x50] sm:$0xff] %vm1526, %v1520
      %1538 = vst.msk [vmem:[#allocation2 + $0x58] sm:$0xff] %vm1526, %v1521
      %1539 = vst.msk [vmem:[#allocation2 + $0x60] sm:$0xff] %vm1526, %v1522
      %1540 = vst.msk [vmem:[#allocation2 + $0x68] sm:$0xff] %vm1526, %v1523
      %1541 = vst.msk [vmem:[#allocation2 + $0x70] sm:$0xff] %vm1526, %v1524
      %1542 = vst.msk [vmem:[#allocation2 + $0x78] sm:$0xff] %vm1526, %v1525
      %v1543 = vld [vmem:[#allocation2] sm:$0xff]
      %v1544 = vld [vmem:[#allocation2 + $0x8] sm:$0xff]
      %v1545 = vld [vmem:[#allocation2 + $0x10] sm:$0xff]
      %v1546 = vld [vmem:[#allocation2 + $0x18] sm:$0xff]
      %v1547 = vld [vmem:[#allocation2 + $0x20] sm:$0xff]
      %v1548 = vld [vmem:[#allocation2 + $0x28] sm:$0xff]
      %v1549 = vld [vmem:[#allocation2 + $0x30] sm:$0xff]
      %v1550 = vld [vmem:[#allocation2 + $0x38] sm:$0xff]
      %v1551 = vld [vmem:[#allocation2 + $0x40] sm:$0xff]
      %v1552 = vld [vmem:[#allocation2 + $0x48] sm:$0xff]
      %v1553 = vld [vmem:[#allocation2 + $0x50] sm:$0xff]
      %v1554 = vld [vmem:[#allocation2 + $0x58] sm:$0xff]
      %v1555 = vld [vmem:[#allocation2 + $0x60] sm:$0xff]
      %v1556 = vld [vmem:[#allocation2 + $0x68] sm:$0xff]
      %v1557 = vld [vmem:[#allocation2 + $0x70] sm:$0xff]
      %v1558 = vld [vmem:[#allocation2 + $0x78] sm:$0xff]
      %1559 = vst.msk [vmem:[%s216] sm:$0xff] %vm1526, %v1543
      %1560 = vst.msk [vmem:[%s216 + $0x8] sm:$0xff] %vm1526, %v1544
      %1561 = vst.msk [vmem:[%s216 + $0x10] sm:$0xff] %vm1526, %v1545
      %1562 = vst.msk [vmem:[%s216 + $0x18] sm:$0xff] %vm1526, %v1546
      %1563 = vst.msk [vmem:[%s216 + $0x20] sm:$0xff] %vm1526, %v1547
      %1564 = vst.msk [vmem:[%s216 + $0x28] sm:$0xff] %vm1526, %v1548
      %1565 = vst.msk [vmem:[%s216 + $0x30] sm:$0xff] %vm1526, %v1549
      %1566 = vst.msk [vmem:[%s216 + $0x38] sm:$0xff] %vm1526, %v1550
      %1567 = vst.msk [vmem:[%s216 + $0x40] sm:$0xff] %vm1526, %v1551
      %1568 = vst.msk [vmem:[%s216 + $0x48] sm:$0xff] %vm1526, %v1552
      %1569 = vst.msk [vmem:[%s216 + $0x50] sm:$0xff] %vm1526, %v1553
      %1570 = vst.msk [vmem:[%s216 + $0x58] sm:$0xff] %vm1526, %v1554
      %1571 = vst.msk [vmem:[%s216 + $0x60] sm:$0xff] %vm1526, %v1555
      %1572 = vst.msk [vmem:[%s216 + $0x68] sm:$0xff] %vm1526, %v1556
      %1573 = vst.msk [vmem:[%s216 + $0x70] sm:$0xff] %vm1526, %v1557
      %1574 = vst.msk [vmem:[%s216 + $0x78] sm:$0xff] %vm1526, %v1558
      %s1575 = smul.u32 16, %s18
      %p1576 = scmp.lt.s32.totalorder %s1575, 31
      %s1577 = scalar_select %p1576, %s1575, 31
      %p1578 = scmp.lt.s32.totalorder %s19, 0
      %s1579 = scalar_select %p1578, %s19, 0
      %s1580 = sadd.s32 %s1579, %s1577
      %s1581 = smul.addr %s1580, 8
      %s1582 = scalar_lea.vmem %s2, %s1581
      // Predicated region
      $region33: #{tpu_custom_call.1} parent=27 // pred_check
        %p1583 = pneg %p108
      $region34: #{tpu_custom_call.1} parent=27 // pred_check_branch
        %1585 = sbr.rel (%p1583) target = $region36
      $region35: #{tpu_custom_call.1} parent=27 // pred_region
        %s1586 = smul.u32 16, %s18
      $region36: #{tpu_custom_call.1} parent=27 // pred_fallthru
        _
    $region28: #{tpu_custom_call.1} parent=5 // pred_fallthru
      _
    %p1587 = scmp.le.s32.totalorder 2, %s8
    // Predicated region
    $region37: #{tpu_custom_call.1} parent=5 // pred_check
      %p1588 = pneg %p1587
    $region38: #{tpu_custom_call.1} parent=5 // pred_check_branch
      %1590 = sbr.rel (%p1588) target = $region40
    $region39: #{tpu_custom_call.1} parent=5 // pred_region
      %s1591 = ssub.s32 %s8, 2
      // Predicated region
      $region41: #{tpu_custom_call.1} parent=39 // pred_check
        %p1592 = pneg %p114
      $region42: #{tpu_custom_call.1} parent=39 // pred_check_branch
        %1594 = sbr.rel (%p1592) target = $region44
      $region43: #{tpu_custom_call.1} parent=39 // pred_region
        %s1595 = smul.u32 16, %s21
        %p1596 = scmp.lt.s32.totalorder %s1595, 31
        %s1597 = scalar_select %p1596, %s1595, 31
        %p1598 = scmp.lt.s32.totalorder %s22, 0
        %s1599 = scalar_select %p1598, %s22, 0
        %s1600 = sadd.s32 %s1599, %s1597
        %s1601 = smul.addr %s1600, 8
        %s1602 = scalar_lea.vmem %s2, %s1601
      $region44: #{tpu_custom_call.1} parent=39 // pred_fallthru
        _
    $region40: #{tpu_custom_call.1} parent=5 // pred_fallthru
      _
  $region6: #{tpu_custom_call.1} parent=0 // loop_footer
    %s12 = sadd.s32 1, %s8
  $region7: #{tpu_custom_call.1} parent=0 // loop_footer_branch
    %7 = sbr.rel target = $region3
  $region8: #{tpu_custom_call.1} parent=0 // loop_exit
    _

</llo_original>
